<compile_context>
chip_gen: v7x
topology: tpu7x:2x2x1
jax: 0.10.0
libtpu: 0.0.40
codegen_flags: <defaults>
</compile_context>

<pallas_src>
import functools
import math

import jax
import jax.numpy as jnp
from jax.experimental import pallas as pl
from jax.experimental.pallas import tpu as pltpu


def _lstm_fc_kernel(x_ref, *refs, num_layers, seq_len, batch, hidden):
    """Fused multi-layer LSTM (zero initial state) + final Linear.

    x_ref:  (T*B, input_dim)  time-major flattened input (row = t*B + b)
    refs:   [w_ih_0, w_hh_0, b_0, ..., w_ih_{L-1}, w_hh_{L-1}, b_{L-1},
             w_fc, b_fc, out_ref, seq_scratch]
    """
    H, B, T = hidden, batch, seq_len

    n_layer_refs = 3 * num_layers
    layer_refs = refs[:n_layer_refs]
    w_fc_ref = refs[n_layer_refs]
    b_fc_ref = refs[n_layer_refs + 1]
    out_ref = refs[n_layer_refs + 2]
    seq_ref = refs[n_layer_refs + 3]          # VMEM scratch, (T*B, H)

    h_last = None
    for l in range(num_layers):
        w_ih = layer_refs[3 * l][...]          # (in_l, 4H) -- pre-transposed
        w_hh = layer_refs[3 * l + 1][...]      # (H, 4H)    -- pre-transposed
        b = layer_refs[3 * l + 2][...]         # (1, 4H)    -- b_ih + b_hh

        # Input-to-hidden projection for ALL time steps in one GEMM
        # (transpose-free, M = T*B instead of B).
        x_l = x_ref[...] if l == 0 else seq_ref[...]                     # (T*B, in_l)
        xp = jnp.dot(x_l, w_ih, preferred_element_type=jnp.float32) + b  # (T*B, 4H)

        h = jnp.zeros((B, H), jnp.float32)
        c = jnp.zeros((B, H), jnp.float32)
        for t in range(T):  # sequential recurrence, statically unrolled (T small)
            gates = xp[t * B:(t + 1) * B, :] + jnp.dot(
                h, w_hh, preferred_element_type=jnp.float32)             # (B, 4H)
            # PyTorch gate order: i, f, g, o
            i_g = jax.nn.sigmoid(gates[:, 0 * H:1 * H])
            f_g = jax.nn.sigmoid(gates[:, 1 * H:2 * H])
            g_g = jnp.tanh(gates[:, 2 * H:3 * H])
            o_g = jax.nn.sigmoid(gates[:, 3 * H:4 * H])
            c = f_g * c + i_g * g_g
            h = o_g * jnp.tanh(c)
            if l + 1 < num_layers:
                # Stash this layer's output as the next layer's input sequence.
                seq_ref[t * B:(t + 1) * B, :] = h
        h_last = h                                                        # (B, H)

    # Final Linear on the last time step of the last layer.
    y = jnp.dot(h_last, w_fc_ref[...],
                preferred_element_type=jnp.float32) + b_fc_ref[...]       # (B, out)
    out_ref[...] = y.astype(out_ref.dtype)


def stock_predictor_forward(x, params, *, num_layers, hidden_dim):
    """x: (B, T, input_dim) float32 -> (B, output_dim)."""
    B, T, input_dim = x.shape
    output_dim = params["w_fc"].shape[1]

    # Time-major flatten once in the wrapper: row index = t*B + b.  This lets
    # the kernel do each layer's input projection as a single GEMM and slice
    # time steps along the leading (sublane) axis only.
    x2d = jnp.transpose(x, (1, 0, 2)).reshape(T * B, input_dim)

    flat = []
    for l in range(num_layers):
        flat += [params[f"w_ih_{l}"],
                 params[f"w_hh_{l}"],
                 params[f"b_{l}"].reshape(1, 4 * hidden_dim)]
    flat += [params["w_fc"], params["b_fc"].reshape(1, output_dim)]

    kernel = functools.partial(_lstm_fc_kernel, num_layers=num_layers,
                               seq_len=T, batch=B, hidden=hidden_dim)

    return pl.pallas_call(
        kernel,
        out_shape=jax.ShapeDtypeStruct((B, output_dim), x.dtype),
        scratch_shapes=[pltpu.VMEM((T * B, hidden_dim), jnp.float32)],
    )(x2d, *flat)


def init_params(key, input_dim, hidden_dim, num_layers, output_dim):
    """PyTorch-style U(-1/sqrt(H), 1/sqrt(H)) init, weights pre-transposed."""
    params = {}
    k = 1.0 / math.sqrt(hidden_dim)
    keys = jax.random.split(key, 4 * num_layers + 2)
    idx = 0
    for l in range(num_layers):
        in_l = input_dim if l == 0 else hidden_dim
        params[f"w_ih_{l}"] = jax.random.uniform(
            keys[idx], (in_l, 4 * hidden_dim), jnp.float32, -k, k); idx += 1
        params[f"w_hh_{l}"] = jax.random.uniform(
            keys[idx], (hidden_dim, 4 * hidden_dim), jnp.float32, -k, k); idx += 1
        b_ih = jax.random.uniform(keys[idx], (4 * hidden_dim,), jnp.float32, -k, k); idx += 1
        b_hh = jax.random.uniform(keys[idx], (4 * hidden_dim,), jnp.float32, -k, k); idx += 1
        params[f"b_{l}"] = b_ih + b_hh
    params["w_fc"] = jax.random.uniform(
        keys[idx], (hidden_dim, output_dim), jnp.float32, -k, k); idx += 1
    params["b_fc"] = jax.random.uniform(
        keys[idx], (output_dim,), jnp.float32, -k, k)
    return params


def reference_forward(x, params, *, num_layers, hidden_dim):
    """Pure-JAX reference mirroring the PyTorch module (zero h0/c0)."""
    B, T, _ = x.shape
    H = hidden_dim
    seq = x
    h_last = None
    for l in range(num_layers):
        w_ih, w_hh, b = params[f"w_ih_{l}"], params[f"w_hh_{l}"], params[f"b_{l}"]
        h = jnp.zeros((B, H), jnp.float32)
        c = jnp.zeros((B, H), jnp.float32)
        outs = []
        for t in range(T):
            gates = seq[:, t, :] @ w_ih + h @ w_hh + b
            i_g = jax.nn.sigmoid(gates[:, 0 * H:1 * H])
            f_g = jax.nn.sigmoid(gates[:, 1 * H:2 * H])
            g_g = jnp.tanh(gates[:, 2 * H:3 * H])
            o_g = jax.nn.sigmoid(gates[:, 3 * H:4 * H])
            c = f_g * c + i_g * g_g
            h = o_g * jnp.tanh(c)
            outs.append(h)
        seq = jnp.stack(outs, axis=1)
        h_last = h
    return h_last @ params["w_fc"] + params["b_fc"]


if __name__ == "__main__":
    key = jax.random.PRNGKey(0)
    kx, kp = jax.random.split(key)

    B, T = 2, 8                    # batch=2, sequence length=8
    INPUT_DIM, HIDDEN_DIM = 8, 32  # per-step features, hidden=32
    NUM_LAYERS, OUTPUT_DIM = 2, 4

    x = jax.random.normal(kx, (B, T, INPUT_DIM), jnp.float32)
    params = init_params(kp, INPUT_DIM, HIDDEN_DIM, NUM_LAYERS, OUTPUT_DIM)

    out = stock_predictor_forward(x, params, num_layers=NUM_LAYERS,
                                  hidden_dim=HIDDEN_DIM)
    out = jax.block_until_ready(out)

    ref = reference_forward(x, params, num_layers=NUM_LAYERS,
                            hidden_dim=HIDDEN_DIM)
    assert out.shape == (B, OUTPUT_DIM)
    assert jnp.allclose(out, ref, atol=1e-4, rtol=1e-4)

    print("KERNEL_OK")
</pallas_src>

<mosaic_0001>
module attributes {stable_mosaic.version = 11 : i64} {
  func.func @_lstm_fc_kernel(%arg0: memref<16x8xf32, #tpu.memory_space<vmem>>, %arg1: memref<8x128xf32, #tpu.memory_space<vmem>>, %arg2: memref<32x128xf32, #tpu.memory_space<vmem>>, %arg3: memref<1x128xf32, #tpu.memory_space<vmem>>, %arg4: memref<32x128xf32, #tpu.memory_space<vmem>>, %arg5: memref<32x128xf32, #tpu.memory_space<vmem>>, %arg6: memref<1x128xf32, #tpu.memory_space<vmem>>, %arg7: memref<32x4xf32, #tpu.memory_space<vmem>>, %arg8: memref<1x4xf32, #tpu.memory_space<vmem>>, %arg9: memref<2x4xf32, #tpu.memory_space<vmem>>, %arg10: memref<16x32xf32, #tpu.memory_space<vmem>>) attributes {dimension_semantics = [], scalar_prefetch = 0 : i64, scratch_operands = 1 : i64, tpu.core_type = #tpu.core_type<tc>} {
    %c0 = arith.constant 0 : index
    %c0_0 = arith.constant 0 : index
    %0 = vector.load %arg1[%c0, %c0_0] : memref<8x128xf32, #tpu.memory_space<vmem>>, vector<8x128xf32>
    %c0_1 = arith.constant 0 : index
    %c0_2 = arith.constant 0 : index
    %1 = vector.load %arg2[%c0_1, %c0_2] : memref<32x128xf32, #tpu.memory_space<vmem>>, vector<32x128xf32>
    %c0_3 = arith.constant 0 : index
    %c0_4 = arith.constant 0 : index
    %2 = vector.load %arg3[%c0_3, %c0_4] : memref<1x128xf32, #tpu.memory_space<vmem>>, vector<1x128xf32>
    %c0_5 = arith.constant 0 : index
    %c0_6 = arith.constant 0 : index
    %3 = vector.load %arg0[%c0_5, %c0_6] : memref<16x8xf32, #tpu.memory_space<vmem>>, vector<16x8xf32>
    %cst = arith.constant dense<0.000000e+00> : vector<16x128xf32>
    %4 = tpu.matmul %3, %0, %cst {dimension_numbers = #tpu.dot_dimension_numbers<[1], [0], [0], [1], [0, 0, 1, 1], [], []>} : vector<16x8xf32>, vector<8x128xf32>, vector<16x128xf32> -> vector<16x128xf32>
    %5 = vector.broadcast %2 : vector<1x128xf32> to vector<16x128xf32>
    %6 = arith.addf %4, %5 : vector<16x128xf32>
    %cst_7 = arith.constant 0.000000e+00 : f32
    %7 = vector.broadcast %cst_7 : f32 to vector<2x32xf32>
    %cst_8 = arith.constant 0.000000e+00 : f32
    %8 = vector.broadcast %cst_8 : f32 to vector<2x32xf32>
    %9 = vector.extract_strided_slice %6 {offsets = [0, 0], sizes = [2, 128], strides = [1, 1]} : vector<16x128xf32> to vector<2x128xf32>
    %cst_9 = arith.constant dense<0.000000e+00> : vector<2x128xf32>
    %10 = tpu.matmul %7, %1, %cst_9 {dimension_numbers = #tpu.dot_dimension_numbers<[1], [0], [0], [1], [0, 0, 1, 1], [], []>} : vector<2x32xf32>, vector<32x128xf32>, vector<2x128xf32> -> vector<2x128xf32>
    %11 = arith.addf %9, %10 : vector<2x128xf32>
    %12 = vector.extract_strided_slice %11 {offsets = [0, 0], sizes = [2, 32], strides = [1, 1]} : vector<2x128xf32> to vector<2x32xf32>
    %13 = arith.negf %12 : vector<2x32xf32>
    %14 = math.exp %13 : vector<2x32xf32>
    %cst_10 = arith.constant 1.000000e+00 : f32
    %15 = vector.broadcast %cst_10 : f32 to vector<2x32xf32>
    %16 = arith.addf %15, %14 : vector<2x32xf32>
    %17 = arith.divf %15, %16 : vector<2x32xf32>
    %18 = vector.extract_strided_slice %11 {offsets = [0, 32], sizes = [2, 32], strides = [1, 1]} : vector<2x128xf32> to vector<2x32xf32>
    %19 = arith.negf %18 : vector<2x32xf32>
    %20 = math.exp %19 : vector<2x32xf32>
    %cst_11 = arith.constant 1.000000e+00 : f32
    %21 = vector.broadcast %cst_11 : f32 to vector<2x32xf32>
    %22 = arith.addf %21, %20 : vector<2x32xf32>
    %23 = arith.divf %21, %22 : vector<2x32xf32>
    %24 = vector.extract_strided_slice %11 {offsets = [0, 64], sizes = [2, 32], strides = [1, 1]} : vector<2x128xf32> to vector<2x32xf32>
    %25 = math.tanh %24 : vector<2x32xf32>
    %26 = vector.extract_strided_slice %11 {offsets = [0, 96], sizes = [2, 32], strides = [1, 1]} : vector<2x128xf32> to vector<2x32xf32>
    %27 = arith.negf %26 : vector<2x32xf32>
    %28 = math.exp %27 : vector<2x32xf32>
    %cst_12 = arith.constant 1.000000e+00 : f32
    %29 = vector.broadcast %cst_12 : f32 to vector<2x32xf32>
    %30 = arith.addf %29, %28 : vector<2x32xf32>
    %31 = arith.divf %29, %30 : vector<2x32xf32>
    %32 = arith.mulf %23, %8 : vector<2x32xf32>
    %33 = arith.mulf %17, %25 : vector<2x32xf32>
    %34 = arith.addf %32, %33 : vector<2x32xf32>
    %35 = math.tanh %34 : vector<2x32xf32>
    %36 = arith.mulf %31, %35 : vector<2x32xf32>
    %c0_13 = arith.constant 0 : index
    %c0_14 = arith.constant 0 : index
    %37 = vector.load %arg10[%c0_13, %c0_14] : memref<16x32xf32, #tpu.memory_space<vmem>>, vector<2x32xf32>
    tpu.vector_store %arg10[%c0_13, %c0_14], %36 {strides = array<i32>} : memref<16x32xf32, #tpu.memory_space<vmem>>, vector<2x32xf32>,
    %38 = vector.extract_strided_slice %6 {offsets = [2, 0], sizes = [2, 128], strides = [1, 1]} : vector<16x128xf32> to vector<2x128xf32>
    %cst_15 = arith.constant dense<0.000000e+00> : vector<2x128xf32>
    %39 = tpu.matmul %36, %1, %cst_15 {dimension_numbers = #tpu.dot_dimension_numbers<[1], [0], [0], [1], [0, 0, 1, 1], [], []>} : vector<2x32xf32>, vector<32x128xf32>, vector<2x128xf32> -> vector<2x128xf32>
    %40 = arith.addf %38, %39 : vector<2x128xf32>
    %41 = vector.extract_strided_slice %40 {offsets = [0, 0], sizes = [2, 32], strides = [1, 1]} : vector<2x128xf32> to vector<2x32xf32>
    %42 = arith.negf %41 : vector<2x32xf32>
    %43 = math.exp %42 : vector<2x32xf32>
    %cst_16 = arith.constant 1.000000e+00 : f32
    %44 = vector.broadcast %cst_16 : f32 to vector<2x32xf32>
    %45 = arith.addf %44, %43 : vector<2x32xf32>
    %46 = arith.divf %44, %45 : vector<2x32xf32>
    %47 = vector.extract_strided_slice %40 {offsets = [0, 32], sizes = [2, 32], strides = [1, 1]} : vector<2x128xf32> to vector<2x32xf32>
    %48 = arith.negf %47 : vector<2x32xf32>
    %49 = math.exp %48 : vector<2x32xf32>
    %cst_17 = arith.constant 1.000000e+00 : f32
    %50 = vector.broadcast %cst_17 : f32 to vector<2x32xf32>
    %51 = arith.addf %50, %49 : vector<2x32xf32>
    %52 = arith.divf %50, %51 : vector<2x32xf32>
    %53 = vector.extract_strided_slice %40 {offsets = [0, 64], sizes = [2, 32], strides = [1, 1]} : vector<2x128xf32> to vector<2x32xf32>
    %54 = math.tanh %53 : vector<2x32xf32>
    %55 = vector.extract_strided_slice %40 {offsets = [0, 96], sizes = [2, 32], strides = [1, 1]} : vector<2x128xf32> to vector<2x32xf32>
    %56 = arith.negf %55 : vector<2x32xf32>
    %57 = math.exp %56 : vector<2x32xf32>
    %cst_18 = arith.constant 1.000000e+00 : f32
    %58 = vector.broadcast %cst_18 : f32 to vector<2x32xf32>
    %59 = arith.addf %58, %57 : vector<2x32xf32>
    %60 = arith.divf %58, %59 : vector<2x32xf32>
    %61 = arith.mulf %52, %34 : vector<2x32xf32>
    %62 = arith.mulf %46, %54 : vector<2x32xf32>
    %63 = arith.addf %61, %62 : vector<2x32xf32>
    %64 = math.tanh %63 : vector<2x32xf32>
    %65 = arith.mulf %60, %64 : vector<2x32xf32>
    %c2 = arith.constant 2 : index
    %c0_19 = arith.constant 0 : index
    %66 = vector.load %arg10[%c2, %c0_19] : memref<16x32xf32, #tpu.memory_space<vmem>>, vector<2x32xf32>
    tpu.vector_store %arg10[%c2, %c0_19], %65 {strides = array<i32>} : memref<16x32xf32, #tpu.memory_space<vmem>>, vector<2x32xf32>,
    %67 = vector.extract_strided_slice %6 {offsets = [4, 0], sizes = [2, 128], strides = [1, 1]} : vector<16x128xf32> to vector<2x128xf32>
    %cst_20 = arith.constant dense<0.000000e+00> : vector<2x128xf32>
    %68 = tpu.matmul %65, %1, %cst_20 {dimension_numbers = #tpu.dot_dimension_numbers<[1], [0], [0], [1], [0, 0, 1, 1], [], []>} : vector<2x32xf32>, vector<32x128xf32>, vector<2x128xf32> -> vector<2x128xf32>
    %69 = arith.addf %67, %68 : vector<2x128xf32>
    %70 = vector.extract_strided_slice %69 {offsets = [0, 0], sizes = [2, 32], strides = [1, 1]} : vector<2x128xf32> to vector<2x32xf32>
    %71 = arith.negf %70 : vector<2x32xf32>
    %72 = math.exp %71 : vector<2x32xf32>
    %cst_21 = arith.constant 1.000000e+00 : f32
    %73 = vector.broadcast %cst_21 : f32 to vector<2x32xf32>
    %74 = arith.addf %73, %72 : vector<2x32xf32>
    %75 = arith.divf %73, %74 : vector<2x32xf32>
    %76 = vector.extract_strided_slice %69 {offsets = [0, 32], sizes = [2, 32], strides = [1, 1]} : vector<2x128xf32> to vector<2x32xf32>
    %77 = arith.negf %76 : vector<2x32xf32>
    %78 = math.exp %77 : vector<2x32xf32>
    %cst_22 = arith.constant 1.000000e+00 : f32
    %79 = vector.broadcast %cst_22 : f32 to vector<2x32xf32>
    %80 = arith.addf %79, %78 : vector<2x32xf32>
    %81 = arith.divf %79, %80 : vector<2x32xf32>
    %82 = vector.extract_strided_slice %69 {offsets = [0, 64], sizes = [2, 32], strides = [1, 1]} : vector<2x128xf32> to vector<2x32xf32>
    %83 = math.tanh %82 : vector<2x32xf32>
    %84 = vector.extract_strided_slice %69 {offsets = [0, 96], sizes = [2, 32], strides = [1, 1]} : vector<2x128xf32> to vector<2x32xf32>
    %85 = arith.negf %84 : vector<2x32xf32>
    %86 = math.exp %85 : vector<2x32xf32>
    %cst_23 = arith.constant 1.000000e+00 : f32
    %87 = vector.broadcast %cst_23 : f32 to vector<2x32xf32>
    %88 = arith.addf %87, %86 : vector<2x32xf32>
    %89 = arith.divf %87, %88 : vector<2x32xf32>
    %90 = arith.mulf %81, %63 : vector<2x32xf32>
    %91 = arith.mulf %75, %83 : vector<2x32xf32>
    %92 = arith.addf %90, %91 : vector<2x32xf32>
    %93 = math.tanh %92 : vector<2x32xf32>
    %94 = arith.mulf %89, %93 : vector<2x32xf32>
    %c4 = arith.constant 4 : index
    %c0_24 = arith.constant 0 : index
    %95 = vector.load %arg10[%c4, %c0_24] : memref<16x32xf32, #tpu.memory_space<vmem>>, vector<2x32xf32>
    tpu.vector_store %arg10[%c4, %c0_24], %94 {strides = array<i32>} : memref<16x32xf32, #tpu.memory_space<vmem>>, vector<2x32xf32>,
    %96 = vector.extract_strided_slice %6 {offsets = [6, 0], sizes = [2, 128], strides = [1, 1]} : vector<16x128xf32> to vector<2x128xf32>
    %cst_25 = arith.constant dense<0.000000e+00> : vector<2x128xf32>
    %97 = tpu.matmul %94, %1, %cst_25 {dimension_numbers = #tpu.dot_dimension_numbers<[1], [0], [0], [1], [0, 0, 1, 1], [], []>} : vector<2x32xf32>, vector<32x128xf32>, vector<2x128xf32> -> vector<2x128xf32>
    %98 = arith.addf %96, %97 : vector<2x128xf32>
    %99 = vector.extract_strided_slice %98 {offsets = [0, 0], sizes = [2, 32], strides = [1, 1]} : vector<2x128xf32> to vector<2x32xf32>
    %100 = arith.negf %99 : vector<2x32xf32>
    %101 = math.exp %100 : vector<2x32xf32>
    %cst_26 = arith.constant 1.000000e+00 : f32
    %102 = vector.broadcast %cst_26 : f32 to vector<2x32xf32>
    %103 = arith.addf %102, %101 : vector<2x32xf32>
    %104 = arith.divf %102, %103 : vector<2x32xf32>
    %105 = vector.extract_strided_slice %98 {offsets = [0, 32], sizes = [2, 32], strides = [1, 1]} : vector<2x128xf32> to vector<2x32xf32>
    %106 = arith.negf %105 : vector<2x32xf32>
    %107 = math.exp %106 : vector<2x32xf32>
    %cst_27 = arith.constant 1.000000e+00 : f32
    %108 = vector.broadcast %cst_27 : f32 to vector<2x32xf32>
    %109 = arith.addf %108, %107 : vector<2x32xf32>
    %110 = arith.divf %108, %109 : vector<2x32xf32>
    %111 = vector.extract_strided_slice %98 {offsets = [0, 64], sizes = [2, 32], strides = [1, 1]} : vector<2x128xf32> to vector<2x32xf32>
    %112 = math.tanh %111 : vector<2x32xf32>
    %113 = vector.extract_strided_slice %98 {offsets = [0, 96], sizes = [2, 32], strides = [1, 1]} : vector<2x128xf32> to vector<2x32xf32>
    %114 = arith.negf %113 : vector<2x32xf32>
    %115 = math.exp %114 : vector<2x32xf32>
    %cst_28 = arith.constant 1.000000e+00 : f32
    %116 = vector.broadcast %cst_28 : f32 to vector<2x32xf32>
    %117 = arith.addf %116, %115 : vector<2x32xf32>
    %118 = arith.divf %116, %117 : vector<2x32xf32>
    %119 = arith.mulf %110, %92 : vector<2x32xf32>
    %120 = arith.mulf %104, %112 : vector<2x32xf32>
    %121 = arith.addf %119, %120 : vector<2x32xf32>
    %122 = math.tanh %121 : vector<2x32xf32>
    %123 = arith.mulf %118, %122 : vector<2x32xf32>
    %c6 = arith.constant 6 : index
    %c0_29 = arith.constant 0 : index
    %124 = vector.load %arg10[%c6, %c0_29] : memref<16x32xf32, #tpu.memory_space<vmem>>, vector<2x32xf32>
    tpu.vector_store %arg10[%c6, %c0_29], %123 {strides = array<i32>} : memref<16x32xf32, #tpu.memory_space<vmem>>, vector<2x32xf32>,
    %125 = vector.extract_strided_slice %6 {offsets = [8, 0], sizes = [2, 128], strides = [1, 1]} : vector<16x128xf32> to vector<2x128xf32>
    %cst_30 = arith.constant dense<0.000000e+00> : vector<2x128xf32>
    %126 = tpu.matmul %123, %1, %cst_30 {dimension_numbers = #tpu.dot_dimension_numbers<[1], [0], [0], [1], [0, 0, 1, 1], [], []>} : vector<2x32xf32>, vector<32x128xf32>, vector<2x128xf32> -> vector<2x128xf32>
    %127 = arith.addf %125, %126 : vector<2x128xf32>
    %128 = vector.extract_strided_slice %127 {offsets = [0, 0], sizes = [2, 32], strides = [1, 1]} : vector<2x128xf32> to vector<2x32xf32>
    %129 = arith.negf %128 : vector<2x32xf32>
    %130 = math.exp %129 : vector<2x32xf32>
    %cst_31 = arith.constant 1.000000e+00 : f32
    %131 = vector.broadcast %cst_31 : f32 to vector<2x32xf32>
    %132 = arith.addf %131, %130 : vector<2x32xf32>
    %133 = arith.divf %131, %132 : vector<2x32xf32>
    %134 = vector.extract_strided_slice %127 {offsets = [0, 32], sizes = [2, 32], strides = [1, 1]} : vector<2x128xf32> to vector<2x32xf32>
    %135 = arith.negf %134 : vector<2x32xf32>
    %136 = math.exp %135 : vector<2x32xf32>
    %cst_32 = arith.constant 1.000000e+00 : f32
    %137 = vector.broadcast %cst_32 : f32 to vector<2x32xf32>
    %138 = arith.addf %137, %136 : vector<2x32xf32>
    %139 = arith.divf %137, %138 : vector<2x32xf32>
    %140 = vector.extract_strided_slice %127 {offsets = [0, 64], sizes = [2, 32], strides = [1, 1]} : vector<2x128xf32> to vector<2x32xf32>
    %141 = math.tanh %140 : vector<2x32xf32>
    %142 = vector.extract_strided_slice %127 {offsets = [0, 96], sizes = [2, 32], strides = [1, 1]} : vector<2x128xf32> to vector<2x32xf32>
    %143 = arith.negf %142 : vector<2x32xf32>
    %144 = math.exp %143 : vector<2x32xf32>
    %cst_33 = arith.constant 1.000000e+00 : f32
    %145 = vector.broadcast %cst_33 : f32 to vector<2x32xf32>
    %146 = arith.addf %145, %144 : vector<2x32xf32>
    %147 = arith.divf %145, %146 : vector<2x32xf32>
    %148 = arith.mulf %139, %121 : vector<2x32xf32>
    %149 = arith.mulf %133, %141 : vector<2x32xf32>
    %150 = arith.addf %148, %149 : vector<2x32xf32>
    %151 = math.tanh %150 : vector<2x32xf32>
    %152 = arith.mulf %147, %151 : vector<2x32xf32>
    %c8 = arith.constant 8 : index
    %c0_34 = arith.constant 0 : index
    %153 = vector.load %arg10[%c8, %c0_34] : memref<16x32xf32, #tpu.memory_space<vmem>>, vector<2x32xf32>
    tpu.vector_store %arg10[%c8, %c0_34], %152 {strides = array<i32>} : memref<16x32xf32, #tpu.memory_space<vmem>>, vector<2x32xf32>,
    %154 = vector.extract_strided_slice %6 {offsets = [10, 0], sizes = [2, 128], strides = [1, 1]} : vector<16x128xf32> to vector<2x128xf32>
    %cst_35 = arith.constant dense<0.000000e+00> : vector<2x128xf32>
    %155 = tpu.matmul %152, %1, %cst_35 {dimension_numbers = #tpu.dot_dimension_numbers<[1], [0], [0], [1], [0, 0, 1, 1], [], []>} : vector<2x32xf32>, vector<32x128xf32>, vector<2x128xf32> -> vector<2x128xf32>
    %156 = arith.addf %154, %155 : vector<2x128xf32>
    %157 = vector.extract_strided_slice %156 {offsets = [0, 0], sizes = [2, 32], strides = [1, 1]} : vector<2x128xf32> to vector<2x32xf32>
    %158 = arith.negf %157 : vector<2x32xf32>
    %159 = math.exp %158 : vector<2x32xf32>
    %cst_36 = arith.constant 1.000000e+00 : f32
    %160 = vector.broadcast %cst_36 : f32 to vector<2x32xf32>
    %161 = arith.addf %160, %159 : vector<2x32xf32>
    %162 = arith.divf %160, %161 : vector<2x32xf32>
    %163 = vector.extract_strided_slice %156 {offsets = [0, 32], sizes = [2, 32], strides = [1, 1]} : vector<2x128xf32> to vector<2x32xf32>
    %164 = arith.negf %163 : vector<2x32xf32>
    %165 = math.exp %164 : vector<2x32xf32>
    %cst_37 = arith.constant 1.000000e+00 : f32
    %166 = vector.broadcast %cst_37 : f32 to vector<2x32xf32>
    %167 = arith.addf %166, %165 : vector<2x32xf32>
    %168 = arith.divf %166, %167 : vector<2x32xf32>
    %169 = vector.extract_strided_slice %156 {offsets = [0, 64], sizes = [2, 32], strides = [1, 1]} : vector<2x128xf32> to vector<2x32xf32>
    %170 = math.tanh %169 : vector<2x32xf32>
    %171 = vector.extract_strided_slice %156 {offsets = [0, 96], sizes = [2, 32], strides = [1, 1]} : vector<2x128xf32> to vector<2x32xf32>
    %172 = arith.negf %171 : vector<2x32xf32>
    %173 = math.exp %172 : vector<2x32xf32>
    %cst_38 = arith.constant 1.000000e+00 : f32
    %174 = vector.broadcast %cst_38 : f32 to vector<2x32xf32>
    %175 = arith.addf %174, %173 : vector<2x32xf32>
    %176 = arith.divf %174, %175 : vector<2x32xf32>
    %177 = arith.mulf %168, %150 : vector<2x32xf32>
    %178 = arith.mulf %162, %170 : vector<2x32xf32>
    %179 = arith.addf %177, %178 : vector<2x32xf32>
    %180 = math.tanh %179 : vector<2x32xf32>
    %181 = arith.mulf %176, %180 : vector<2x32xf32>
    %c10 = arith.constant 10 : index
    %c0_39 = arith.constant 0 : index
    %182 = vector.load %arg10[%c10, %c0_39] : memref<16x32xf32, #tpu.memory_space<vmem>>, vector<2x32xf32>
    tpu.vector_store %arg10[%c10, %c0_39], %181 {strides = array<i32>} : memref<16x32xf32, #tpu.memory_space<vmem>>, vector<2x32xf32>,
    %183 = vector.extract_strided_slice %6 {offsets = [12, 0], sizes = [2, 128], strides = [1, 1]} : vector<16x128xf32> to vector<2x128xf32>
    %cst_40 = arith.constant dense<0.000000e+00> : vector<2x128xf32>
    %184 = tpu.matmul %181, %1, %cst_40 {dimension_numbers = #tpu.dot_dimension_numbers<[1], [0], [0], [1], [0, 0, 1, 1], [], []>} : vector<2x32xf32>, vector<32x128xf32>, vector<2x128xf32> -> vector<2x128xf32>
    %185 = arith.addf %183, %184 : vector<2x128xf32>
    %186 = vector.extract_strided_slice %185 {offsets = [0, 0], sizes = [2, 32], strides = [1, 1]} : vector<2x128xf32> to vector<2x32xf32>
    %187 = arith.negf %186 : vector<2x32xf32>
    %188 = math.exp %187 : vector<2x32xf32>
    %cst_41 = arith.constant 1.000000e+00 : f32
    %189 = vector.broadcast %cst_41 : f32 to vector<2x32xf32>
    %190 = arith.addf %189, %188 : vector<2x32xf32>
    %191 = arith.divf %189, %190 : vector<2x32xf32>
    %192 = vector.extract_strided_slice %185 {offsets = [0, 32], sizes = [2, 32], strides = [1, 1]} : vector<2x128xf32> to vector<2x32xf32>
    %193 = arith.negf %192 : vector<2x32xf32>
    %194 = math.exp %193 : vector<2x32xf32>
    %cst_42 = arith.constant 1.000000e+00 : f32
    %195 = vector.broadcast %cst_42 : f32 to vector<2x32xf32>
    %196 = arith.addf %195, %194 : vector<2x32xf32>
    %197 = arith.divf %195, %196 : vector<2x32xf32>
    %198 = vector.extract_strided_slice %185 {offsets = [0, 64], sizes = [2, 32], strides = [1, 1]} : vector<2x128xf32> to vector<2x32xf32>
    %199 = math.tanh %198 : vector<2x32xf32>
    %200 = vector.extract_strided_slice %185 {offsets = [0, 96], sizes = [2, 32], strides = [1, 1]} : vector<2x128xf32> to vector<2x32xf32>
    %201 = arith.negf %200 : vector<2x32xf32>
    %202 = math.exp %201 : vector<2x32xf32>
    %cst_43 = arith.constant 1.000000e+00 : f32
    %203 = vector.broadcast %cst_43 : f32 to vector<2x32xf32>
    %204 = arith.addf %203, %202 : vector<2x32xf32>
    %205 = arith.divf %203, %204 : vector<2x32xf32>
    %206 = arith.mulf %197, %179 : vector<2x32xf32>
    %207 = arith.mulf %191, %199 : vector<2x32xf32>
    %208 = arith.addf %206, %207 : vector<2x32xf32>
    %209 = math.tanh %208 : vector<2x32xf32>
    %210 = arith.mulf %205, %209 : vector<2x32xf32>
    %c12 = arith.constant 12 : index
    %c0_44 = arith.constant 0 : index
    %211 = vector.load %arg10[%c12, %c0_44] : memref<16x32xf32, #tpu.memory_space<vmem>>, vector<2x32xf32>
    tpu.vector_store %arg10[%c12, %c0_44], %210 {strides = array<i32>} : memref<16x32xf32, #tpu.memory_space<vmem>>, vector<2x32xf32>,
    %212 = vector.extract_strided_slice %6 {offsets = [14, 0], sizes = [2, 128], strides = [1, 1]} : vector<16x128xf32> to vector<2x128xf32>
    %cst_45 = arith.constant dense<0.000000e+00> : vector<2x128xf32>
    %213 = tpu.matmul %210, %1, %cst_45 {dimension_numbers = #tpu.dot_dimension_numbers<[1], [0], [0], [1], [0, 0, 1, 1], [], []>} : vector<2x32xf32>, vector<32x128xf32>, vector<2x128xf32> -> vector<2x128xf32>
    %214 = arith.addf %212, %213 : vector<2x128xf32>
    %215 = vector.extract_strided_slice %214 {offsets = [0, 0], sizes = [2, 32], strides = [1, 1]} : vector<2x128xf32> to vector<2x32xf32>
    %216 = arith.negf %215 : vector<2x32xf32>
    %217 = math.exp %216 : vector<2x32xf32>
    %cst_46 = arith.constant 1.000000e+00 : f32
    %218 = vector.broadcast %cst_46 : f32 to vector<2x32xf32>
    %219 = arith.addf %218, %217 : vector<2x32xf32>
    %220 = arith.divf %218, %219 : vector<2x32xf32>
    %221 = vector.extract_strided_slice %214 {offsets = [0, 32], sizes = [2, 32], strides = [1, 1]} : vector<2x128xf32> to vector<2x32xf32>
    %222 = arith.negf %221 : vector<2x32xf32>
    %223 = math.exp %222 : vector<2x32xf32>
    %cst_47 = arith.constant 1.000000e+00 : f32
    %224 = vector.broadcast %cst_47 : f32 to vector<2x32xf32>
    %225 = arith.addf %224, %223 : vector<2x32xf32>
    %226 = arith.divf %224, %225 : vector<2x32xf32>
    %227 = vector.extract_strided_slice %214 {offsets = [0, 64], sizes = [2, 32], strides = [1, 1]} : vector<2x128xf32> to vector<2x32xf32>
    %228 = math.tanh %227 : vector<2x32xf32>
    %229 = vector.extract_strided_slice %214 {offsets = [0, 96], sizes = [2, 32], strides = [1, 1]} : vector<2x128xf32> to vector<2x32xf32>
    %230 = arith.negf %229 : vector<2x32xf32>
    %231 = math.exp %230 : vector<2x32xf32>
    %cst_48 = arith.constant 1.000000e+00 : f32
    %232 = vector.broadcast %cst_48 : f32 to vector<2x32xf32>
    %233 = arith.addf %232, %231 : vector<2x32xf32>
    %234 = arith.divf %232, %233 : vector<2x32xf32>
    %235 = arith.mulf %226, %208 : vector<2x32xf32>
    %236 = arith.mulf %220, %228 : vector<2x32xf32>
    %237 = arith.addf %235, %236 : vector<2x32xf32>
    %238 = math.tanh %237 : vector<2x32xf32>
    %239 = arith.mulf %234, %238 : vector<2x32xf32>
    %c14 = arith.constant 14 : index
    %c0_49 = arith.constant 0 : index
    %240 = vector.load %arg10[%c14, %c0_49] : memref<16x32xf32, #tpu.memory_space<vmem>>, vector<2x32xf32>
    tpu.vector_store %arg10[%c14, %c0_49], %239 {strides = array<i32>} : memref<16x32xf32, #tpu.memory_space<vmem>>, vector<2x32xf32>,
    %c0_50 = arith.constant 0 : index
    %c0_51 = arith.constant 0 : index
    %241 = vector.load %arg4[%c0_50, %c0_51] : memref<32x128xf32, #tpu.memory_space<vmem>>, vector<32x128xf32>
    %c0_52 = arith.constant 0 : index
    %c0_53 = arith.constant 0 : index
    %242 = vector.load %arg5[%c0_52, %c0_53] : memref<32x128xf32, #tpu.memory_space<vmem>>, vector<32x128xf32>
    %c0_54 = arith.constant 0 : index
    %c0_55 = arith.constant 0 : index
    %243 = vector.load %arg6[%c0_54, %c0_55] : memref<1x128xf32, #tpu.memory_space<vmem>>, vector<1x128xf32>
    %c0_56 = arith.constant 0 : index
    %c0_57 = arith.constant 0 : index
    %244 = vector.load %arg10[%c0_56, %c0_57] : memref<16x32xf32, #tpu.memory_space<vmem>>, vector<16x32xf32>
    %cst_58 = arith.constant dense<0.000000e+00> : vector<16x128xf32>
    %245 = tpu.matmul %244, %241, %cst_58 {dimension_numbers = #tpu.dot_dimension_numbers<[1], [0], [0], [1], [0, 0, 1, 1], [], []>} : vector<16x32xf32>, vector<32x128xf32>, vector<16x128xf32> -> vector<16x128xf32>
    %246 = vector.broadcast %243 : vector<1x128xf32> to vector<16x128xf32>
    %247 = arith.addf %245, %246 : vector<16x128xf32>
    %cst_59 = arith.constant 0.000000e+00 : f32
    %248 = vector.broadcast %cst_59 : f32 to vector<2x32xf32>
    %cst_60 = arith.constant 0.000000e+00 : f32
    %249 = vector.broadcast %cst_60 : f32 to vector<2x32xf32>
    %250 = vector.extract_strided_slice %247 {offsets = [0, 0], sizes = [2, 128], strides = [1, 1]} : vector<16x128xf32> to vector<2x128xf32>
    %cst_61 = arith.constant dense<0.000000e+00> : vector<2x128xf32>
    %251 = tpu.matmul %248, %242, %cst_61 {dimension_numbers = #tpu.dot_dimension_numbers<[1], [0], [0], [1], [0, 0, 1, 1], [], []>} : vector<2x32xf32>, vector<32x128xf32>, vector<2x128xf32> -> vector<2x128xf32>
    %252 = arith.addf %250, %251 : vector<2x128xf32>
    %253 = vector.extract_strided_slice %252 {offsets = [0, 0], sizes = [2, 32], strides = [1, 1]} : vector<2x128xf32> to vector<2x32xf32>
    %254 = arith.negf %253 : vector<2x32xf32>
    %255 = math.exp %254 : vector<2x32xf32>
    %cst_62 = arith.constant 1.000000e+00 : f32
    %256 = vector.broadcast %cst_62 : f32 to vector<2x32xf32>
    %257 = arith.addf %256, %255 : vector<2x32xf32>
    %258 = arith.divf %256, %257 : vector<2x32xf32>
    %259 = vector.extract_strided_slice %252 {offsets = [0, 32], sizes = [2, 32], strides = [1, 1]} : vector<2x128xf32> to vector<2x32xf32>
    %260 = arith.negf %259 : vector<2x32xf32>
    %261 = math.exp %260 : vector<2x32xf32>
    %cst_63 = arith.constant 1.000000e+00 : f32
    %262 = vector.broadcast %cst_63 : f32 to vector<2x32xf32>
    %263 = arith.addf %262, %261 : vector<2x32xf32>
    %264 = arith.divf %262, %263 : vector<2x32xf32>
    %265 = vector.extract_strided_slice %252 {offsets = [0, 64], sizes = [2, 32], strides = [1, 1]} : vector<2x128xf32> to vector<2x32xf32>
    %266 = math.tanh %265 : vector<2x32xf32>
    %267 = vector.extract_strided_slice %252 {offsets = [0, 96], sizes = [2, 32], strides = [1, 1]} : vector<2x128xf32> to vector<2x32xf32>
    %268 = arith.negf %267 : vector<2x32xf32>
    %269 = math.exp %268 : vector<2x32xf32>
    %cst_64 = arith.constant 1.000000e+00 : f32
    %270 = vector.broadcast %cst_64 : f32 to vector<2x32xf32>
    %271 = arith.addf %270, %269 : vector<2x32xf32>
    %272 = arith.divf %270, %271 : vector<2x32xf32>
    %273 = arith.mulf %264, %249 : vector<2x32xf32>
    %274 = arith.mulf %258, %266 : vector<2x32xf32>
    %275 = arith.addf %273, %274 : vector<2x32xf32>
    %276 = math.tanh %275 : vector<2x32xf32>
    %277 = arith.mulf %272, %276 : vector<2x32xf32>
    %278 = vector.extract_strided_slice %247 {offsets = [2, 0], sizes = [2, 128], strides = [1, 1]} : vector<16x128xf32> to vector<2x128xf32>
    %cst_65 = arith.constant dense<0.000000e+00> : vector<2x128xf32>
    %279 = tpu.matmul %277, %242, %cst_65 {dimension_numbers = #tpu.dot_dimension_numbers<[1], [0], [0], [1], [0, 0, 1, 1], [], []>} : vector<2x32xf32>, vector<32x128xf32>, vector<2x128xf32> -> vector<2x128xf32>
    %280 = arith.addf %278, %279 : vector<2x128xf32>
    %281 = vector.extract_strided_slice %280 {offsets = [0, 0], sizes = [2, 32], strides = [1, 1]} : vector<2x128xf32> to vector<2x32xf32>
    %282 = arith.negf %281 : vector<2x32xf32>
    %283 = math.exp %282 : vector<2x32xf32>
    %cst_66 = arith.constant 1.000000e+00 : f32
    %284 = vector.broadcast %cst_66 : f32 to vector<2x32xf32>
    %285 = arith.addf %284, %283 : vector<2x32xf32>
    %286 = arith.divf %284, %285 : vector<2x32xf32>
    %287 = vector.extract_strided_slice %280 {offsets = [0, 32], sizes = [2, 32], strides = [1, 1]} : vector<2x128xf32> to vector<2x32xf32>
    %288 = arith.negf %287 : vector<2x32xf32>
    %289 = math.exp %288 : vector<2x32xf32>
    %cst_67 = arith.constant 1.000000e+00 : f32
    %290 = vector.broadcast %cst_67 : f32 to vector<2x32xf32>
    %291 = arith.addf %290, %289 : vector<2x32xf32>
    %292 = arith.divf %290, %291 : vector<2x32xf32>
    %293 = vector.extract_strided_slice %280 {offsets = [0, 64], sizes = [2, 32], strides = [1, 1]} : vector<2x128xf32> to vector<2x32xf32>
    %294 = math.tanh %293 : vector<2x32xf32>
    %295 = vector.extract_strided_slice %280 {offsets = [0, 96], sizes = [2, 32], strides = [1, 1]} : vector<2x128xf32> to vector<2x32xf32>
    %296 = arith.negf %295 : vector<2x32xf32>
    %297 = math.exp %296 : vector<2x32xf32>
    %cst_68 = arith.constant 1.000000e+00 : f32
    %298 = vector.broadcast %cst_68 : f32 to vector<2x32xf32>
    %299 = arith.addf %298, %297 : vector<2x32xf32>
    %300 = arith.divf %298, %299 : vector<2x32xf32>
    %301 = arith.mulf %292, %275 : vector<2x32xf32>
    %302 = arith.mulf %286, %294 : vector<2x32xf32>
    %303 = arith.addf %301, %302 : vector<2x32xf32>
    %304 = math.tanh %303 : vector<2x32xf32>
    %305 = arith.mulf %300, %304 : vector<2x32xf32>
    %306 = vector.extract_strided_slice %247 {offsets = [4, 0], sizes = [2, 128], strides = [1, 1]} : vector<16x128xf32> to vector<2x128xf32>
    %cst_69 = arith.constant dense<0.000000e+00> : vector<2x128xf32>
    %307 = tpu.matmul %305, %242, %cst_69 {dimension_numbers = #tpu.dot_dimension_numbers<[1], [0], [0], [1], [0, 0, 1, 1], [], []>} : vector<2x32xf32>, vector<32x128xf32>, vector<2x128xf32> -> vector<2x128xf32>
    %308 = arith.addf %306, %307 : vector<2x128xf32>
    %309 = vector.extract_strided_slice %308 {offsets = [0, 0], sizes = [2, 32], strides = [1, 1]} : vector<2x128xf32> to vector<2x32xf32>
    %310 = arith.negf %309 : vector<2x32xf32>
    %311 = math.exp %310 : vector<2x32xf32>
    %cst_70 = arith.constant 1.000000e+00 : f32
    %312 = vector.broadcast %cst_70 : f32 to vector<2x32xf32>
    %313 = arith.addf %312, %311 : vector<2x32xf32>
    %314 = arith.divf %312, %313 : vector<2x32xf32>
    %315 = vector.extract_strided_slice %308 {offsets = [0, 32], sizes = [2, 32], strides = [1, 1]} : vector<2x128xf32> to vector<2x32xf32>
    %316 = arith.negf %315 : vector<2x32xf32>
    %317 = math.exp %316 : vector<2x32xf32>
    %cst_71 = arith.constant 1.000000e+00 : f32
    %318 = vector.broadcast %cst_71 : f32 to vector<2x32xf32>
    %319 = arith.addf %318, %317 : vector<2x32xf32>
    %320 = arith.divf %318, %319 : vector<2x32xf32>
    %321 = vector.extract_strided_slice %308 {offsets = [0, 64], sizes = [2, 32], strides = [1, 1]} : vector<2x128xf32> to vector<2x32xf32>
    %322 = math.tanh %321 : vector<2x32xf32>
    %323 = vector.extract_strided_slice %308 {offsets = [0, 96], sizes = [2, 32], strides = [1, 1]} : vector<2x128xf32> to vector<2x32xf32>
    %324 = arith.negf %323 : vector<2x32xf32>
    %325 = math.exp %324 : vector<2x32xf32>
    %cst_72 = arith.constant 1.000000e+00 : f32
    %326 = vector.broadcast %cst_72 : f32 to vector<2x32xf32>
    %327 = arith.addf %326, %325 : vector<2x32xf32>
    %328 = arith.divf %326, %327 : vector<2x32xf32>
    %329 = arith.mulf %320, %303 : vector<2x32xf32>
    %330 = arith.mulf %314, %322 : vector<2x32xf32>
    %331 = arith.addf %329, %330 : vector<2x32xf32>
    %332 = math.tanh %331 : vector<2x32xf32>
    %333 = arith.mulf %328, %332 : vector<2x32xf32>
    %334 = vector.extract_strided_slice %247 {offsets = [6, 0], sizes = [2, 128], strides = [1, 1]} : vector<16x128xf32> to vector<2x128xf32>
    %cst_73 = arith.constant dense<0.000000e+00> : vector<2x128xf32>
    %335 = tpu.matmul %333, %242, %cst_73 {dimension_numbers = #tpu.dot_dimension_numbers<[1], [0], [0], [1], [0, 0, 1, 1], [], []>} : vector<2x32xf32>, vector<32x128xf32>, vector<2x128xf32> -> vector<2x128xf32>
    %336 = arith.addf %334, %335 : vector<2x128xf32>
    %337 = vector.extract_strided_slice %336 {offsets = [0, 0], sizes = [2, 32], strides = [1, 1]} : vector<2x128xf32> to vector<2x32xf32>
    %338 = arith.negf %337 : vector<2x32xf32>
    %339 = math.exp %338 : vector<2x32xf32>
    %cst_74 = arith.constant 1.000000e+00 : f32
    %340 = vector.broadcast %cst_74 : f32 to vector<2x32xf32>
    %341 = arith.addf %340, %339 : vector<2x32xf32>
    %342 = arith.divf %340, %341 : vector<2x32xf32>
    %343 = vector.extract_strided_slice %336 {offsets = [0, 32], sizes = [2, 32], strides = [1, 1]} : vector<2x128xf32> to vector<2x32xf32>
    %344 = arith.negf %343 : vector<2x32xf32>
    %345 = math.exp %344 : vector<2x32xf32>
    %cst_75 = arith.constant 1.000000e+00 : f32
    %346 = vector.broadcast %cst_75 : f32 to vector<2x32xf32>
    %347 = arith.addf %346, %345 : vector<2x32xf32>
    %348 = arith.divf %346, %347 : vector<2x32xf32>
    %349 = vector.extract_strided_slice %336 {offsets = [0, 64], sizes = [2, 32], strides = [1, 1]} : vector<2x128xf32> to vector<2x32xf32>
    %350 = math.tanh %349 : vector<2x32xf32>
    %351 = vector.extract_strided_slice %336 {offsets = [0, 96], sizes = [2, 32], strides = [1, 1]} : vector<2x128xf32> to vector<2x32xf32>
    %352 = arith.negf %351 : vector<2x32xf32>
    %353 = math.exp %352 : vector<2x32xf32>
    %cst_76 = arith.constant 1.000000e+00 : f32
    %354 = vector.broadcast %cst_76 : f32 to vector<2x32xf32>
    %355 = arith.addf %354, %353 : vector<2x32xf32>
    %356 = arith.divf %354, %355 : vector<2x32xf32>
    %357 = arith.mulf %348, %331 : vector<2x32xf32>
    %358 = arith.mulf %342, %350 : vector<2x32xf32>
    %359 = arith.addf %357, %358 : vector<2x32xf32>
    %360 = math.tanh %359 : vector<2x32xf32>
    %361 = arith.mulf %356, %360 : vector<2x32xf32>
    %362 = vector.extract_strided_slice %247 {offsets = [8, 0], sizes = [2, 128], strides = [1, 1]} : vector<16x128xf32> to vector<2x128xf32>
    %cst_77 = arith.constant dense<0.000000e+00> : vector<2x128xf32>
    %363 = tpu.matmul %361, %242, %cst_77 {dimension_numbers = #tpu.dot_dimension_numbers<[1], [0], [0], [1], [0, 0, 1, 1], [], []>} : vector<2x32xf32>, vector<32x128xf32>, vector<2x128xf32> -> vector<2x128xf32>
    %364 = arith.addf %362, %363 : vector<2x128xf32>
    %365 = vector.extract_strided_slice %364 {offsets = [0, 0], sizes = [2, 32], strides = [1, 1]} : vector<2x128xf32> to vector<2x32xf32>
    %366 = arith.negf %365 : vector<2x32xf32>
    %367 = math.exp %366 : vector<2x32xf32>
    %cst_78 = arith.constant 1.000000e+00 : f32
    %368 = vector.broadcast %cst_78 : f32 to vector<2x32xf32>
    %369 = arith.addf %368, %367 : vector<2x32xf32>
    %370 = arith.divf %368, %369 : vector<2x32xf32>
    %371 = vector.extract_strided_slice %364 {offsets = [0, 32], sizes = [2, 32], strides = [1, 1]} : vector<2x128xf32> to vector<2x32xf32>
    %372 = arith.negf %371 : vector<2x32xf32>
    %373 = math.exp %372 : vector<2x32xf32>
    %cst_79 = arith.constant 1.000000e+00 : f32
    %374 = vector.broadcast %cst_79 : f32 to vector<2x32xf32>
    %375 = arith.addf %374, %373 : vector<2x32xf32>
    %376 = arith.divf %374, %375 : vector<2x32xf32>
    %377 = vector.extract_strided_slice %364 {offsets = [0, 64], sizes = [2, 32], strides = [1, 1]} : vector<2x128xf32> to vector<2x32xf32>
    %378 = math.tanh %377 : vector<2x32xf32>
    %379 = vector.extract_strided_slice %364 {offsets = [0, 96], sizes = [2, 32], strides = [1, 1]} : vector<2x128xf32> to vector<2x32xf32>
    %380 = arith.negf %379 : vector<2x32xf32>
    %381 = math.exp %380 : vector<2x32xf32>
    %cst_80 = arith.constant 1.000000e+00 : f32
    %382 = vector.broadcast %cst_80 : f32 to vector<2x32xf32>
    %383 = arith.addf %382, %381 : vector<2x32xf32>
    %384 = arith.divf %382, %383 : vector<2x32xf32>
    %385 = arith.mulf %376, %359 : vector<2x32xf32>
    %386 = arith.mulf %370, %378 : vector<2x32xf32>
    %387 = arith.addf %385, %386 : vector<2x32xf32>
    %388 = math.tanh %387 : vector<2x32xf32>
    %389 = arith.mulf %384, %388 : vector<2x32xf32>
    %390 = vector.extract_strided_slice %247 {offsets = [10, 0], sizes = [2, 128], strides = [1, 1]} : vector<16x128xf32> to vector<2x128xf32>
    %cst_81 = arith.constant dense<0.000000e+00> : vector<2x128xf32>
    %391 = tpu.matmul %389, %242, %cst_81 {dimension_numbers = #tpu.dot_dimension_numbers<[1], [0], [0], [1], [0, 0, 1, 1], [], []>} : vector<2x32xf32>, vector<32x128xf32>, vector<2x128xf32> -> vector<2x128xf32>
    %392 = arith.addf %390, %391 : vector<2x128xf32>
    %393 = vector.extract_strided_slice %392 {offsets = [0, 0], sizes = [2, 32], strides = [1, 1]} : vector<2x128xf32> to vector<2x32xf32>
    %394 = arith.negf %393 : vector<2x32xf32>
    %395 = math.exp %394 : vector<2x32xf32>
    %cst_82 = arith.constant 1.000000e+00 : f32
    %396 = vector.broadcast %cst_82 : f32 to vector<2x32xf32>
    %397 = arith.addf %396, %395 : vector<2x32xf32>
    %398 = arith.divf %396, %397 : vector<2x32xf32>
    %399 = vector.extract_strided_slice %392 {offsets = [0, 32], sizes = [2, 32], strides = [1, 1]} : vector<2x128xf32> to vector<2x32xf32>
    %400 = arith.negf %399 : vector<2x32xf32>
    %401 = math.exp %400 : vector<2x32xf32>
    %cst_83 = arith.constant 1.000000e+00 : f32
    %402 = vector.broadcast %cst_83 : f32 to vector<2x32xf32>
    %403 = arith.addf %402, %401 : vector<2x32xf32>
    %404 = arith.divf %402, %403 : vector<2x32xf32>
    %405 = vector.extract_strided_slice %392 {offsets = [0, 64], sizes = [2, 32], strides = [1, 1]} : vector<2x128xf32> to vector<2x32xf32>
    %406 = math.tanh %405 : vector<2x32xf32>
    %407 = vector.extract_strided_slice %392 {offsets = [0, 96], sizes = [2, 32], strides = [1, 1]} : vector<2x128xf32> to vector<2x32xf32>
    %408 = arith.negf %407 : vector<2x32xf32>
    %409 = math.exp %408 : vector<2x32xf32>
    %cst_84 = arith.constant 1.000000e+00 : f32
    %410 = vector.broadcast %cst_84 : f32 to vector<2x32xf32>
    %411 = arith.addf %410, %409 : vector<2x32xf32>
    %412 = arith.divf %410, %411 : vector<2x32xf32>
    %413 = arith.mulf %404, %387 : vector<2x32xf32>
    %414 = arith.mulf %398, %406 : vector<2x32xf32>
    %415 = arith.addf %413, %414 : vector<2x32xf32>
    %416 = math.tanh %415 : vector<2x32xf32>
    %417 = arith.mulf %412, %416 : vector<2x32xf32>
    %418 = vector.extract_strided_slice %247 {offsets = [12, 0], sizes = [2, 128], strides = [1, 1]} : vector<16x128xf32> to vector<2x128xf32>
    %cst_85 = arith.constant dense<0.000000e+00> : vector<2x128xf32>
    %419 = tpu.matmul %417, %242, %cst_85 {dimension_numbers = #tpu.dot_dimension_numbers<[1], [0], [0], [1], [0, 0, 1, 1], [], []>} : vector<2x32xf32>, vector<32x128xf32>, vector<2x128xf32> -> vector<2x128xf32>
    %420 = arith.addf %418, %419 : vector<2x128xf32>
    %421 = vector.extract_strided_slice %420 {offsets = [0, 0], sizes = [2, 32], strides = [1, 1]} : vector<2x128xf32> to vector<2x32xf32>
    %422 = arith.negf %421 : vector<2x32xf32>
    %423 = math.exp %422 : vector<2x32xf32>
    %cst_86 = arith.constant 1.000000e+00 : f32
    %424 = vector.broadcast %cst_86 : f32 to vector<2x32xf32>
    %425 = arith.addf %424, %423 : vector<2x32xf32>
    %426 = arith.divf %424, %425 : vector<2x32xf32>
    %427 = vector.extract_strided_slice %420 {offsets = [0, 32], sizes = [2, 32], strides = [1, 1]} : vector<2x128xf32> to vector<2x32xf32>
    %428 = arith.negf %427 : vector<2x32xf32>
    %429 = math.exp %428 : vector<2x32xf32>
    %cst_87 = arith.constant 1.000000e+00 : f32
    %430 = vector.broadcast %cst_87 : f32 to vector<2x32xf32>
    %431 = arith.addf %430, %429 : vector<2x32xf32>
    %432 = arith.divf %430, %431 : vector<2x32xf32>
    %433 = vector.extract_strided_slice %420 {offsets = [0, 64], sizes = [2, 32], strides = [1, 1]} : vector<2x128xf32> to vector<2x32xf32>
    %434 = math.tanh %433 : vector<2x32xf32>
    %435 = vector.extract_strided_slice %420 {offsets = [0, 96], sizes = [2, 32], strides = [1, 1]} : vector<2x128xf32> to vector<2x32xf32>
    %436 = arith.negf %435 : vector<2x32xf32>
    %437 = math.exp %436 : vector<2x32xf32>
    %cst_88 = arith.constant 1.000000e+00 : f32
    %438 = vector.broadcast %cst_88 : f32 to vector<2x32xf32>
    %439 = arith.addf %438, %437 : vector<2x32xf32>
    %440 = arith.divf %438, %439 : vector<2x32xf32>
    %441 = arith.mulf %432, %415 : vector<2x32xf32>
    %442 = arith.mulf %426, %434 : vector<2x32xf32>
    %443 = arith.addf %441, %442 : vector<2x32xf32>
    %444 = math.tanh %443 : vector<2x32xf32>
    %445 = arith.mulf %440, %444 : vector<2x32xf32>
    %446 = vector.extract_strided_slice %247 {offsets = [14, 0], sizes = [2, 128], strides = [1, 1]} : vector<16x128xf32> to vector<2x128xf32>
    %cst_89 = arith.constant dense<0.000000e+00> : vector<2x128xf32>
    %447 = tpu.matmul %445, %242, %cst_89 {dimension_numbers = #tpu.dot_dimension_numbers<[1], [0], [0], [1], [0, 0, 1, 1], [], []>} : vector<2x32xf32>, vector<32x128xf32>, vector<2x128xf32> -> vector<2x128xf32>
    %448 = arith.addf %446, %447 : vector<2x128xf32>
    %449 = vector.extract_strided_slice %448 {offsets = [0, 0], sizes = [2, 32], strides = [1, 1]} : vector<2x128xf32> to vector<2x32xf32>
    %450 = arith.negf %449 : vector<2x32xf32>
    %451 = math.exp %450 : vector<2x32xf32>
    %cst_90 = arith.constant 1.000000e+00 : f32
    %452 = vector.broadcast %cst_90 : f32 to vector<2x32xf32>
    %453 = arith.addf %452, %451 : vector<2x32xf32>
    %454 = arith.divf %452, %453 : vector<2x32xf32>
    %455 = vector.extract_strided_slice %448 {offsets = [0, 32], sizes = [2, 32], strides = [1, 1]} : vector<2x128xf32> to vector<2x32xf32>
    %456 = arith.negf %455 : vector<2x32xf32>
    %457 = math.exp %456 : vector<2x32xf32>
    %cst_91 = arith.constant 1.000000e+00 : f32
    %458 = vector.broadcast %cst_91 : f32 to vector<2x32xf32>
    %459 = arith.addf %458, %457 : vector<2x32xf32>
    %460 = arith.divf %458, %459 : vector<2x32xf32>
    %461 = vector.extract_strided_slice %448 {offsets = [0, 64], sizes = [2, 32], strides = [1, 1]} : vector<2x128xf32> to vector<2x32xf32>
    %462 = math.tanh %461 : vector<2x32xf32>
    %463 = vector.extract_strided_slice %448 {offsets = [0, 96], sizes = [2, 32], strides = [1, 1]} : vector<2x128xf32> to vector<2x32xf32>
    %464 = arith.negf %463 : vector<2x32xf32>
    %465 = math.exp %464 : vector<2x32xf32>
    %cst_92 = arith.constant 1.000000e+00 : f32
    %466 = vector.broadcast %cst_92 : f32 to vector<2x32xf32>
    %467 = arith.addf %466, %465 : vector<2x32xf32>
    %468 = arith.divf %466, %467 : vector<2x32xf32>
    %469 = arith.mulf %460, %443 : vector<2x32xf32>
    %470 = arith.mulf %454, %462 : vector<2x32xf32>
    %471 = arith.addf %469, %470 : vector<2x32xf32>
    %472 = math.tanh %471 : vector<2x32xf32>
    %473 = arith.mulf %468, %472 : vector<2x32xf32>
    %c0_93 = arith.constant 0 : index
    %c0_94 = arith.constant 0 : index
    %474 = vector.load %arg7[%c0_93, %c0_94] : memref<32x4xf32, #tpu.memory_space<vmem>>, vector<32x4xf32>
    %cst_95 = arith.constant dense<0.000000e+00> : vector<2x4xf32>
    %475 = tpu.matmul %473, %474, %cst_95 {dimension_numbers = #tpu.dot_dimension_numbers<[1], [0], [0], [1], [0, 0, 1, 1], [], []>} : vector<2x32xf32>, vector<32x4xf32>, vector<2x4xf32> -> vector<2x4xf32>
    %c0_96 = arith.constant 0 : index
    %c0_97 = arith.constant 0 : index
    %476 = vector.load %arg8[%c0_96, %c0_97] : memref<1x4xf32, #tpu.memory_space<vmem>>, vector<1x4xf32>
    %477 = vector.broadcast %476 : vector<1x4xf32> to vector<2x4xf32>
    %478 = arith.addf %475, %477 : vector<2x4xf32>
    %c0_98 = arith.constant 0 : index
    %c0_99 = arith.constant 0 : index
    %479 = vector.load %arg9[%c0_98, %c0_99] : memref<2x4xf32, #tpu.memory_space<vmem>>, vector<2x4xf32>
    tpu.vector_store %arg9[%c0_98, %c0_99], %478 {strides = array<i32>} : memref<2x4xf32, #tpu.memory_space<vmem>>, vector<2x4xf32>,
    return
  }
}

</mosaic_0001>

<llo_original>
// kernel: tpu_custom_call.1
$region0: #{tpu_custom_call.1}
  #allocation0 [shape = 'u32[]', space=smem, size = 0x4, offset = 0x4, fixed_abs, tag = 'smem constant byte address 0x4 - core index']
  #allocation1 [shape = 'u32[144,128]{1,0:T(1,128)}', space=vmem, size = 0x12000, scoped, tag = 'internal scratch']
  #allocation2 [shape = 'f32[16,32]{1,0:T(8,128)}', space=vmem, size = 0x2000, scoped, tag = 'scratch operand']
  %s0 = inlined_call_operand.vmem [shape: f32[16,8], index: 0, kind: input, shape index: {}]
  %s1 = inlined_call_operand.hbm [shape: f32[8,128], index: 1, kind: input, shape index: {}]
  %s2 = inlined_call_operand.vmem [shape: f32[32,128], index: 2, kind: input, shape index: {}]
  %s3 = inlined_call_operand.vmem [shape: f32[1,128], index: 3, kind: input, shape index: {}]
  %s4 = inlined_call_operand.vmem [shape: f32[32,128], index: 4, kind: input, shape index: {}]
  %s5 = inlined_call_operand.hbm [shape: f32[32,128], index: 5, kind: input, shape index: {}]
  %s6 = inlined_call_operand.vmem [shape: f32[1,128], index: 6, kind: input, shape index: {}]
  %s7 = inlined_call_operand.vmem [shape: f32[32,4], index: 7, kind: input, shape index: {}]
  %s8 = inlined_call_operand.vmem [shape: f32[1,4], index: 8, kind: input, shape index: {}]
  %s9 = inlined_call_operand.hbm [shape: f32[2,4], index: 9, kind: output, shape index: {}]
  %s10 = sld [smem:[#allocation0]]
  $region54: #{tpu_custom_call.1} parent=0
    _
  %s12 = ssub.s32 1, %s10
  %s13 = scalar_select 0, %s12, %s10
  $region1: #{tpu_custom_call.1} parent=0
    #allocation3 [shape = 'u8[4096]{0}', space=vmem, size = 0x1000, scoped, tag = 'input window, operand 1, single buffered']
    #allocation4 [shape = 's32[1]{0}', space=sflag, size = 0x4, scoped, tag = 'scoped memory for tpu_custom_call.1']
    #allocation5 [shape = 's32[1]{0}', space=sflag, size = 0x4, scoped, tag = 'scoped memory for tpu_custom_call.1']
    #allocation6 [shape = 'u8[16384]{0}', space=vmem, size = 0x4000, scoped, tag = 'input window, operand 5, single buffered']
    #allocation7 [shape = 's32[1]{0}', space=sflag, size = 0x4, scoped, tag = 'scoped memory for tpu_custom_call.1']
    #allocation8 [shape = 'u8[1024]{0}', space=vmem, size = 0x400, scoped, tag = 'output window, operand 0, single buffered']
    %14 = vsyncpa [#allocation4], 0
    %15 = vsyncpa [#allocation7], 0
    %16 = vsyncpa [#allocation5], 0
    // Predicated region
    $region2: #{tpu_custom_call.1} parent=1 // pred_check
      _
    $region3: #{tpu_custom_call.1} parent=1 // pred_check_branch
      %18 = sbr.rel (0) target = $region5
    $region4: #{tpu_custom_call.1} parent=1 // pred_region
      _
    $region5: #{tpu_custom_call.1} parent=1 // pred_fallthru
      _
    // Predicated region
    $region6: #{tpu_custom_call.1} parent=1 // pred_check
      _
    $region7: #{tpu_custom_call.1} parent=1 // pred_check_branch
      %20 = sbr.rel (0) target = $region9
    $region8: #{tpu_custom_call.1} parent=1 // pred_region
      %s22 = ssub.s32 128, 128
      %23 = vsyncadd [#allocation4], %s22
      %s25 = sshll.u32 [#allocation3], 4
      %s26 = int_to_ptr.vmem [resolvable:$true] %s25
      %28 = dma.hbm_to_vmem [thread:$0]  %s1, 128, %s26, [#allocation4]
    $region9: #{tpu_custom_call.1} parent=1 // pred_fallthru
      _
    // Predicated region
    $region10: #{tpu_custom_call.1} parent=1 // pred_check
      _
    $region11: #{tpu_custom_call.1} parent=1 // pred_check_branch
      %30 = sbr.rel (0) target = $region13
    $region12: #{tpu_custom_call.1} parent=1 // pred_region
      _
    $region13: #{tpu_custom_call.1} parent=1 // pred_fallthru
      _
    // Predicated region
    $region14: #{tpu_custom_call.1} parent=1 // pred_check
      _
    $region15: #{tpu_custom_call.1} parent=1 // pred_check_branch
      %32 = sbr.rel (0) target = $region17
    $region16: #{tpu_custom_call.1} parent=1 // pred_region
      _
    $region17: #{tpu_custom_call.1} parent=1 // pred_fallthru
      _
    // Predicated region
    $region18: #{tpu_custom_call.1} parent=1 // pred_check
      _
    $region19: #{tpu_custom_call.1} parent=1 // pred_check_branch
      %34 = sbr.rel (0) target = $region21
    $region20: #{tpu_custom_call.1} parent=1 // pred_region
      _
    $region21: #{tpu_custom_call.1} parent=1 // pred_fallthru
      _
    // Predicated region
    $region22: #{tpu_custom_call.1} parent=1 // pred_check
      _
    $region23: #{tpu_custom_call.1} parent=1 // pred_check_branch
      %36 = sbr.rel (0) target = $region25
    $region24: #{tpu_custom_call.1} parent=1 // pred_region
      %s38 = ssub.s32 512, 512
      %39 = vsyncadd [#allocation7], %s38
      %s40 = sshll.u32 [#allocation6], 4
      %s41 = int_to_ptr.vmem [resolvable:$true] %s40
      %46 = dma.hbm_to_vmem [thread:$0]  %s5, 512, %s41, [#allocation7], 128, 128, 8
    $region25: #{tpu_custom_call.1} parent=1 // pred_fallthru
      _
    // Predicated region
    $region26: #{tpu_custom_call.1} parent=1 // pred_check
      _
    $region27: #{tpu_custom_call.1} parent=1 // pred_check_branch
      %48 = sbr.rel (0) target = $region29
    $region28: #{tpu_custom_call.1} parent=1 // pred_region
      _
    $region29: #{tpu_custom_call.1} parent=1 // pred_fallthru
      _
    // Predicated region
    $region30: #{tpu_custom_call.1} parent=1 // pred_check
      _
    $region31: #{tpu_custom_call.1} parent=1 // pred_check_branch
      %50 = sbr.rel (0) target = $region33
    $region32: #{tpu_custom_call.1} parent=1 // pred_region
      _
    $region33: #{tpu_custom_call.1} parent=1 // pred_fallthru
      _
    // Predicated region
    $region34: #{tpu_custom_call.1} parent=1 // pred_check
      _
    $region35: #{tpu_custom_call.1} parent=1 // pred_check_branch
      %52 = sbr.rel (0) target = $region37
    $region36: #{tpu_custom_call.1} parent=1 // pred_region
      _
    $region37: #{tpu_custom_call.1} parent=1 // pred_fallthru
      _
    // Predicated region
    $region38: #{tpu_custom_call.1} parent=1 // pred_check
      _
    $region39: #{tpu_custom_call.1} parent=1 // pred_check_branch
      %54 = sbr.rel (0) target = $region41
    $region40: #{tpu_custom_call.1} parent=1 // pred_region
      %55 = dma.done [#allocation4], 128
    $region41: #{tpu_custom_call.1} parent=1 // pred_fallthru
      _
    // Predicated region
    $region42: #{tpu_custom_call.1} parent=1 // pred_check
      _
    $region43: #{tpu_custom_call.1} parent=1 // pred_check_branch
      %57 = sbr.rel (0) target = $region45
    $region44: #{tpu_custom_call.1} parent=1 // pred_region
      %58 = dma.done [#allocation7], 512
    $region45: #{tpu_custom_call.1} parent=1 // pred_fallthru
      _
    %v59 = vld [vmem:[#allocation3] sm:$0xff]
    %v60 = vld [vmem:[%s2] sm:$0xff]
    %v61 = vld [vmem:[%s2 + $0x8] sm:$0xff]
    %v62 = vld [vmem:[%s2 + $0x10] sm:$0xff]
    %v63 = vld [vmem:[%s2 + $0x18] sm:$0xff]
    %v64 = vld [vmem:[%s3] sm:$0x1]
    %v65 = vld [vmem:[%s0] sm:$0xff]
    %v66 = vld [vmem:[%s0 + $0x8] sm:$0xff]
    %v68 = vlaneseq
    %v69 = vshrl.u32 %v68, 7
    %v70 = vsub.s32 0, %v69
    %v71 = vrot.slane %v64, %v70
    %vm73 = vcmask 64512
    %v75 = vsel %vm73, %v65, 0
    %v78 = vsel %vm73, %v66, 0
    %80 = vmatprep.subr.mxu0 0.0
    %81 = vmatpush1.msra.mxu0 %v59
    %82 = vmatprep.subr.mxu0 0.0
    %83 = vmatpush1.msra.mxu0 0.0
    %84 = vmatprep.subr.mxu0 0.0
    %85 = vmatpush1.msra.mxu0 0.0
    %86 = vmatprep.subr.mxu0 0.0
    %87 = vmatpush1.msra.mxu0 0.0
    %88 = vmatprep.subr.mxu0 0.0
    %89 = vmatpush1.msra.mxu0 0.0
    %90 = vmatprep.subr.mxu0 0.0
    %91 = vmatpush1.msra.mxu0 0.0
    %92 = vmatprep.subr.mxu0 0.0
    %93 = vmatpush1.msra.mxu0 0.0
    %94 = vmatprep.subr.mxu0 0.0
    %95 = vmatpush1.msra.mxu0 0.0
    %96 = vmatprep.subr.mxu0 0.0
    %97 = vmatpush1.msra.mxu0 0.0
    %98 = vmatprep.subr.mxu0 0.0
    %99 = vmatpush1.msra.mxu0 0.0
    %100 = vmatprep.subr.mxu0 0.0
    %101 = vmatpush1.msra.mxu0 0.0
    %102 = vmatprep.subr.mxu0 0.0
    %103 = vmatpush1.msra.mxu0 0.0
    %104 = vmatprep.subr.mxu0 0.0
    %105 = vmatpush1.msra.mxu0 0.0
    %106 = vmatprep.subr.mxu0 0.0
    %107 = vmatpush1.msra.mxu0 0.0
    %108 = vmatprep.subr.mxu0 0.0
    %109 = vmatpush1.msra.mxu0 0.0
    %110 = vmatprep.subr.mxu0 0.0
    %111 = vmatpush1.msra.mxu0 0.0
    %112 = vmatprep.subr.mxu0 0.0
    %113 = vmatpush1.msra.mxu0 0.0
    %114 = vmatprep.subr.mxu0 0.0
    %115 = vmatpush1.msra.mxu0 0.0
    %116 = vmatprep.subr.mxu0 0.0
    %117 = vmatpush1.msra.mxu0 0.0
    %118 = vmatprep.subr.mxu0 0.0
    %119 = vmatpush1.msra.mxu0 0.0
    %120 = vmatprep.subr.mxu0 0.0
    %121 = vmatpush1.msra.mxu0 0.0
    %122 = vmatprep.subr.mxu0 0.0
    %123 = vmatpush1.msra.mxu0 0.0
    %124 = vmatprep.subr.mxu0 0.0
    %125 = vmatpush1.msra.mxu0 0.0
    %126 = vmatprep.subr.mxu0 0.0
    %127 = vmatpush1.msra.mxu0 0.0
    %128 = vmatprep.subr.mxu0 0.0
    %129 = vmatpush1.msra.mxu0 0.0
    %130 = vmatprep.subr.mxu0 0.0
    %131 = vmatpush1.msra.mxu0 0.0
    %132 = vmatprep.subr.mxu0 0.0
    %133 = vmatpush1.msra.mxu0 0.0
    %134 = vmatprep.subr.mxu0 0.0
    %135 = vmatpush1.msra.mxu0 0.0
    %136 = vmatprep.subr.mxu0 0.0
    %137 = vmatpush1.msra.mxu0 0.0
    %138 = vmatprep.subr.mxu0 0.0
    %139 = vmatpush1.msra.mxu0 0.0
    %140 = vmatprep.subr.mxu0 0.0
    %141 = vmatpush1.msra.mxu0 0.0
    %142 = vmatprep.subr.mxu0 0.0
    %143 = vmatpush1.msra.mxu0 0.0
    %144 = vmatprep.mubr.f32.mxu0 0.0
    %145 = vmatmul.mubr.f32.gmra.mrb[0].mxu0 %v75
    %v146 = vpop.f32.mrb[0].mxu0
    %v147 = vadd.f32 %v71, %v146
    %v148 = vpop.f32.mrb[0].mxu0
    %149 = vmatprep.mubr.f32.mxu0 0.0
    %150 = vmatmul.mubr.f32.gmra.mrb[0].mxu0 %v78
    %v151 = vpop.f32.mrb[0].mxu0
    %v152 = vadd.f32 %v71, %v151
    %v153 = vpop.f32.mrb[0].mxu0
    %154 = vdwg.mxu0
    %vm155 = vcmask 261120
    %v157 = vsel %vm155, 0.0, 0
    %159 = vmatprep.subr.mxu0 0.0
    %160 = vmatpush1.msra.mxu0 %v60
    %161 = vmatprep.subr.mxu0 0.0
    %162 = vmatpush1.msra.mxu0 %v61
    %163 = vmatprep.subr.mxu0 0.0
    %164 = vmatpush1.msra.mxu0 %v62
    %165 = vmatprep.subr.mxu0 0.0
    %166 = vmatpush1.msra.mxu0 %v63
    %167 = vmatprep.subr.mxu0 0.0
    %168 = vmatpush1.msra.mxu0 0.0
    %169 = vmatprep.subr.mxu0 0.0
    %170 = vmatpush1.msra.mxu0 0.0
    %171 = vmatprep.subr.mxu0 0.0
    %172 = vmatpush1.msra.mxu0 0.0
    %173 = vmatprep.subr.mxu0 0.0
    %174 = vmatpush1.msra.mxu0 0.0
    %175 = vmatprep.subr.mxu0 0.0
    %176 = vmatpush1.msra.mxu0 0.0
    %177 = vmatprep.subr.mxu0 0.0
    %178 = vmatpush1.msra.mxu0 0.0
    %179 = vmatprep.subr.mxu0 0.0
    %180 = vmatpush1.msra.mxu0 0.0
    %181 = vmatprep.subr.mxu0 0.0
    %182 = vmatpush1.msra.mxu0 0.0
    %183 = vmatprep.subr.mxu0 0.0
    %184 = vmatpush1.msra.mxu0 0.0
    %185 = vmatprep.subr.mxu0 0.0
    %186 = vmatpush1.msra.mxu0 0.0
    %187 = vmatprep.subr.mxu0 0.0
    %188 = vmatpush1.msra.mxu0 0.0
    %189 = vmatprep.subr.mxu0 0.0
    %190 = vmatpush1.msra.mxu0 0.0
    %191 = vmatprep.subr.mxu0 0.0
    %192 = vmatpush1.msra.mxu0 0.0
    %193 = vmatprep.subr.mxu0 0.0
    %194 = vmatpush1.msra.mxu0 0.0
    %195 = vmatprep.subr.mxu0 0.0
    %196 = vmatpush1.msra.mxu0 0.0
    %197 = vmatprep.subr.mxu0 0.0
    %198 = vmatpush1.msra.mxu0 0.0
    %199 = vmatprep.subr.mxu0 0.0
    %200 = vmatpush1.msra.mxu0 0.0
    %201 = vmatprep.subr.mxu0 0.0
    %202 = vmatpush1.msra.mxu0 0.0
    %203 = vmatprep.subr.mxu0 0.0
    %204 = vmatpush1.msra.mxu0 0.0
    %205 = vmatprep.subr.mxu0 0.0
    %206 = vmatpush1.msra.mxu0 0.0
    %207 = vmatprep.subr.mxu0 0.0
    %208 = vmatpush1.msra.mxu0 0.0
    %209 = vmatprep.subr.mxu0 0.0
    %210 = vmatpush1.msra.mxu0 0.0
    %211 = vmatprep.subr.mxu0 0.0
    %212 = vmatpush1.msra.mxu0 0.0
    %213 = vmatprep.subr.mxu0 0.0
    %214 = vmatpush1.msra.mxu0 0.0
    %215 = vmatprep.subr.mxu0 0.0
    %216 = vmatpush1.msra.mxu0 0.0
    %217 = vmatprep.subr.mxu0 0.0
    %218 = vmatpush1.msra.mxu0 0.0
    %219 = vmatprep.subr.mxu0 0.0
    %220 = vmatpush1.msra.mxu0 0.0
    %221 = vmatprep.subr.mxu0 0.0
    %222 = vmatpush1.msra.mxu0 0.0
    %223 = vmatprep.mubr.f32.mxu0 0.0
    %224 = vmatmul.mubr.f32.gmra.mrb[0].mxu0 %v157
    %v225 = vpop.f32.mrb[0].mxu0
    %v226 = vadd.f32 0.0, %v225
    %v227 = vpop.f32.mrb[0].mxu0
    %228 = vdwg.mxu0
    %v229 = vadd.f32 %v147, %v226
    %v230 = vxor.u32 %v229, 2147483648
    %v231 = vmul.f32 %v230, 1.442695
    %v232 = vpow.pop %v231
    %v233 = vadd.f32 %v232, 1.0
    %v234 = vrcp.pop %v233
    %v235 = vmul.f32 1.0, %v234
    %v236 = vtanh.pop %v229
    %v237 = vmul.f32 %v235, 0.0
    %239 = vrot.lane.b32.xlu0 %v236, 64
    %v240 = vpop.permute.xlu0 %239
    %v242 = vmul.f32 %v235, %v240
    %244 = vrot.lane.b32.xlu0 %v242, 32
    %v245 = vpop.permute.xlu0 %244
    %v247 = vadd.f32 %v237, %v245
    %v248 = vtanh.pop %v247
    %250 = vrot.lane.b32.xlu0 %v248, 64
    %v251 = vpop.permute.xlu0 %250
    %v253 = vmul.f32 %v235, %v251
    %255 = vrot.lane.b32.xlu0 %v253, 32
    %v256 = vpop.permute.xlu0 %255
    %vm258 = vcmask 254976
    %259 = vst.msk [vmem:[#allocation2] sm:$0x3] %vm258, %v256
    %v260 = vsel %vm155, %v256, 0
    %262 = vmatprep.subr.mxu0 0.0
    %263 = vmatpush1.msra.mxu0 %v60
    %264 = vmatprep.subr.mxu0 0.0
    %265 = vmatpush1.msra.mxu0 %v61
    %266 = vmatprep.subr.mxu0 0.0
    %267 = vmatpush1.msra.mxu0 %v62
    %268 = vmatprep.subr.mxu0 0.0
    %269 = vmatpush1.msra.mxu0 %v63
    %270 = vmatprep.subr.mxu0 0.0
    %271 = vmatpush1.msra.mxu0 0.0
    %272 = vmatprep.subr.mxu0 0.0
    %273 = vmatpush1.msra.mxu0 0.0
    %274 = vmatprep.subr.mxu0 0.0
    %275 = vmatpush1.msra.mxu0 0.0
    %276 = vmatprep.subr.mxu0 0.0
    %277 = vmatpush1.msra.mxu0 0.0
    %278 = vmatprep.subr.mxu0 0.0
    %279 = vmatpush1.msra.mxu0 0.0
    %280 = vmatprep.subr.mxu0 0.0
    %281 = vmatpush1.msra.mxu0 0.0
    %282 = vmatprep.subr.mxu0 0.0
    %283 = vmatpush1.msra.mxu0 0.0
    %284 = vmatprep.subr.mxu0 0.0
    %285 = vmatpush1.msra.mxu0 0.0
    %286 = vmatprep.subr.mxu0 0.0
    %287 = vmatpush1.msra.mxu0 0.0
    %288 = vmatprep.subr.mxu0 0.0
    %289 = vmatpush1.msra.mxu0 0.0
    %290 = vmatprep.subr.mxu0 0.0
    %291 = vmatpush1.msra.mxu0 0.0
    %292 = vmatprep.subr.mxu0 0.0
    %293 = vmatpush1.msra.mxu0 0.0
    %294 = vmatprep.subr.mxu0 0.0
    %295 = vmatpush1.msra.mxu0 0.0
    %296 = vmatprep.subr.mxu0 0.0
    %297 = vmatpush1.msra.mxu0 0.0
    %298 = vmatprep.subr.mxu0 0.0
    %299 = vmatpush1.msra.mxu0 0.0
    %300 = vmatprep.subr.mxu0 0.0
    %301 = vmatpush1.msra.mxu0 0.0
    %302 = vmatprep.subr.mxu0 0.0
    %303 = vmatpush1.msra.mxu0 0.0
    %304 = vmatprep.subr.mxu0 0.0
    %305 = vmatpush1.msra.mxu0 0.0
    %306 = vmatprep.subr.mxu0 0.0
    %307 = vmatpush1.msra.mxu0 0.0
    %308 = vmatprep.subr.mxu0 0.0
    %309 = vmatpush1.msra.mxu0 0.0
    %310 = vmatprep.subr.mxu0 0.0
    %311 = vmatpush1.msra.mxu0 0.0
    %312 = vmatprep.subr.mxu0 0.0
    %313 = vmatpush1.msra.mxu0 0.0
    %314 = vmatprep.subr.mxu0 0.0
    %315 = vmatpush1.msra.mxu0 0.0
    %316 = vmatprep.subr.mxu0 0.0
    %317 = vmatpush1.msra.mxu0 0.0
    %318 = vmatprep.subr.mxu0 0.0
    %319 = vmatpush1.msra.mxu0 0.0
    %320 = vmatprep.subr.mxu0 0.0
    %321 = vmatpush1.msra.mxu0 0.0
    %322 = vmatprep.subr.mxu0 0.0
    %323 = vmatpush1.msra.mxu0 0.0
    %324 = vmatprep.subr.mxu0 0.0
    %325 = vmatpush1.msra.mxu0 0.0
    %326 = vmatprep.mubr.f32.mxu0 0.0
    %327 = vmatmul.mubr.f32.gmra.mrb[0].mxu0 %v260
    %v328 = vpop.f32.mrb[0].mxu0
    %v329 = vadd.f32 0.0, %v328
    %v330 = vpop.f32.mrb[0].mxu0
    %331 = vdwg.mxu0
    %v333 = vrot.slane %v329, 6
    %v335 = vadd.f32 %v147, %v333
    %v336 = vxor.u32 %v335, 2147483648
    %v337 = vmul.f32 %v336, 1.442695
    %v338 = vpow.pop %v337
    %v339 = vadd.f32 %v338, 1.0
    %v340 = vrcp.pop %v339
    %v341 = vmul.f32 1.0, %v340
    %v342 = vtanh.pop %v335
    %v344 = vrot.slane %v247, 6
    %v346 = vmul.f32 %v341, %v344
    %348 = vrot.lane.b32.xlu0 %v342, 64
    %v349 = vpop.permute.xlu0 %348
    %v351 = vmul.f32 %v341, %v349
    %353 = vrot.lane.b32.xlu0 %v351, 32
    %v354 = vpop.permute.xlu0 %353
    %v356 = vadd.f32 %v346, %v354
    %v357 = vtanh.pop %v356
    %359 = vrot.lane.b32.xlu0 %v357, 64
    %v360 = vpop.permute.xlu0 %359
    %v362 = vmul.f32 %v341, %v360
    %364 = vrot.lane.b32.xlu0 %v362, 32
    %v365 = vpop.permute.xlu0 %364
    %vm367 = vcmask 257026
    %368 = vst.msk [vmem:[#allocation2] sm:$0xc] %vm367, %v365
    %v369 = vrot.slane %v362, 2
    %370 = vrot.lane.b32.xlu0 %v369, 32
    %v371 = vpop.permute.xlu0 %370
    %v372 = vsel %vm155, %v371, 0
    %374 = vmatprep.subr.mxu0 0.0
    %375 = vmatpush1.msra.mxu0 %v60
    %376 = vmatprep.subr.mxu0 0.0
    %377 = vmatpush1.msra.mxu0 %v61
    %378 = vmatprep.subr.mxu0 0.0
    %379 = vmatpush1.msra.mxu0 %v62
    %380 = vmatprep.subr.mxu0 0.0
    %381 = vmatpush1.msra.mxu0 %v63
    %382 = vmatprep.subr.mxu0 0.0
    %383 = vmatpush1.msra.mxu0 0.0
    %384 = vmatprep.subr.mxu0 0.0
    %385 = vmatpush1.msra.mxu0 0.0
    %386 = vmatprep.subr.mxu0 0.0
    %387 = vmatpush1.msra.mxu0 0.0
    %388 = vmatprep.subr.mxu0 0.0
    %389 = vmatpush1.msra.mxu0 0.0
    %390 = vmatprep.subr.mxu0 0.0
    %391 = vmatpush1.msra.mxu0 0.0
    %392 = vmatprep.subr.mxu0 0.0
    %393 = vmatpush1.msra.mxu0 0.0
    %394 = vmatprep.subr.mxu0 0.0
    %395 = vmatpush1.msra.mxu0 0.0
    %396 = vmatprep.subr.mxu0 0.0
    %397 = vmatpush1.msra.mxu0 0.0
    %398 = vmatprep.subr.mxu0 0.0
    %399 = vmatpush1.msra.mxu0 0.0
    %400 = vmatprep.subr.mxu0 0.0
    %401 = vmatpush1.msra.mxu0 0.0
    %402 = vmatprep.subr.mxu0 0.0
    %403 = vmatpush1.msra.mxu0 0.0
    %404 = vmatprep.subr.mxu0 0.0
    %405 = vmatpush1.msra.mxu0 0.0
    %406 = vmatprep.subr.mxu0 0.0
    %407 = vmatpush1.msra.mxu0 0.0
    %408 = vmatprep.subr.mxu0 0.0
    %409 = vmatpush1.msra.mxu0 0.0
    %410 = vmatprep.subr.mxu0 0.0
    %411 = vmatpush1.msra.mxu0 0.0
    %412 = vmatprep.subr.mxu0 0.0
    %413 = vmatpush1.msra.mxu0 0.0
    %414 = vmatprep.subr.mxu0 0.0
    %415 = vmatpush1.msra.mxu0 0.0
    %416 = vmatprep.subr.mxu0 0.0
    %417 = vmatpush1.msra.mxu0 0.0
    %418 = vmatprep.subr.mxu0 0.0
    %419 = vmatpush1.msra.mxu0 0.0
    %420 = vmatprep.subr.mxu0 0.0
    %421 = vmatpush1.msra.mxu0 0.0
    %422 = vmatprep.subr.mxu0 0.0
    %423 = vmatpush1.msra.mxu0 0.0
    %424 = vmatprep.subr.mxu0 0.0
    %425 = vmatpush1.msra.mxu0 0.0
    %426 = vmatprep.subr.mxu0 0.0
    %427 = vmatpush1.msra.mxu0 0.0
    %428 = vmatprep.subr.mxu0 0.0
    %429 = vmatpush1.msra.mxu0 0.0
    %430 = vmatprep.subr.mxu0 0.0
    %431 = vmatpush1.msra.mxu0 0.0
    %432 = vmatprep.subr.mxu0 0.0
    %433 = vmatpush1.msra.mxu0 0.0
    %434 = vmatprep.subr.mxu0 0.0
    %435 = vmatpush1.msra.mxu0 0.0
    %436 = vmatprep.subr.mxu0 0.0
    %437 = vmatpush1.msra.mxu0 0.0
    %438 = vmatprep.mubr.f32.mxu0 0.0
    %439 = vmatmul.mubr.f32.gmra.mrb[0].mxu0 %v372
    %v440 = vpop.f32.mrb[0].mxu0
    %v441 = vadd.f32 0.0, %v440
    %v442 = vpop.f32.mrb[0].mxu0
    %443 = vdwg.mxu0
    %v445 = vrot.slane %v441, 4
    %v447 = vadd.f32 %v147, %v445
    %v448 = vxor.u32 %v447, 2147483648
    %v449 = vmul.f32 %v448, 1.442695
    %v450 = vpow.pop %v449
    %v451 = vadd.f32 %v450, 1.0
    %v452 = vrcp.pop %v451
    %v453 = vmul.f32 1.0, %v452
    %v454 = vtanh.pop %v447
    %v456 = vrot.slane %v356, 6
    %v458 = vmul.f32 %v453, %v456
    %460 = vrot.lane.b32.xlu0 %v454, 64
    %v461 = vpop.permute.xlu0 %460
    %v463 = vmul.f32 %v453, %v461
    %465 = vrot.lane.b32.xlu0 %v463, 32
    %v466 = vpop.permute.xlu0 %465
    %v468 = vadd.f32 %v458, %v466
    %v469 = vtanh.pop %v468
    %471 = vrot.lane.b32.xlu0 %v469, 64
    %v472 = vpop.permute.xlu0 %471
    %v474 = vmul.f32 %v453, %v472
    %476 = vrot.lane.b32.xlu0 %v474, 32
    %v477 = vpop.permute.xlu0 %476
    %vm479 = vcmask 259076
    %480 = vst.msk [vmem:[#allocation2] sm:$0x30] %vm479, %v477
    %v481 = vrot.slane %v474, 4
    %482 = vrot.lane.b32.xlu0 %v481, 32
    %v483 = vpop.permute.xlu0 %482
    %v484 = vsel %vm155, %v483, 0
    %486 = vmatprep.subr.mxu0 0.0
    %487 = vmatpush1.msra.mxu0 %v60
    %488 = vmatprep.subr.mxu0 0.0
    %489 = vmatpush1.msra.mxu0 %v61
    %490 = vmatprep.subr.mxu0 0.0
    %491 = vmatpush1.msra.mxu0 %v62
    %492 = vmatprep.subr.mxu0 0.0
    %493 = vmatpush1.msra.mxu0 %v63
    %494 = vmatprep.subr.mxu0 0.0
    %495 = vmatpush1.msra.mxu0 0.0
    %496 = vmatprep.subr.mxu0 0.0
    %497 = vmatpush1.msra.mxu0 0.0
    %498 = vmatprep.subr.mxu0 0.0
    %499 = vmatpush1.msra.mxu0 0.0
    %500 = vmatprep.subr.mxu0 0.0
    %501 = vmatpush1.msra.mxu0 0.0
    %502 = vmatprep.subr.mxu0 0.0
    %503 = vmatpush1.msra.mxu0 0.0
    %504 = vmatprep.subr.mxu0 0.0
    %505 = vmatpush1.msra.mxu0 0.0
    %506 = vmatprep.subr.mxu0 0.0
    %507 = vmatpush1.msra.mxu0 0.0
    %508 = vmatprep.subr.mxu0 0.0
    %509 = vmatpush1.msra.mxu0 0.0
    %510 = vmatprep.subr.mxu0 0.0
    %511 = vmatpush1.msra.mxu0 0.0
    %512 = vmatprep.subr.mxu0 0.0
    %513 = vmatpush1.msra.mxu0 0.0
    %514 = vmatprep.subr.mxu0 0.0
    %515 = vmatpush1.msra.mxu0 0.0
    %516 = vmatprep.subr.mxu0 0.0
    %517 = vmatpush1.msra.mxu0 0.0
    %518 = vmatprep.subr.mxu0 0.0
    %519 = vmatpush1.msra.mxu0 0.0
    %520 = vmatprep.subr.mxu0 0.0
    %521 = vmatpush1.msra.mxu0 0.0
    %522 = vmatprep.subr.mxu0 0.0
    %523 = vmatpush1.msra.mxu0 0.0
    %524 = vmatprep.subr.mxu0 0.0
    %525 = vmatpush1.msra.mxu0 0.0
    %526 = vmatprep.subr.mxu0 0.0
    %527 = vmatpush1.msra.mxu0 0.0
    %528 = vmatprep.subr.mxu0 0.0
    %529 = vmatpush1.msra.mxu0 0.0
    %530 = vmatprep.subr.mxu0 0.0
    %531 = vmatpush1.msra.mxu0 0.0
    %532 = vmatprep.subr.mxu0 0.0
    %533 = vmatpush1.msra.mxu0 0.0
    %534 = vmatprep.subr.mxu0 0.0
    %535 = vmatpush1.msra.mxu0 0.0
    %536 = vmatprep.subr.mxu0 0.0
    %537 = vmatpush1.msra.mxu0 0.0
    %538 = vmatprep.subr.mxu0 0.0
    %539 = vmatpush1.msra.mxu0 0.0
    %540 = vmatprep.subr.mxu0 0.0
    %541 = vmatpush1.msra.mxu0 0.0
    %542 = vmatprep.subr.mxu0 0.0
    %543 = vmatpush1.msra.mxu0 0.0
    %544 = vmatprep.subr.mxu0 0.0
    %545 = vmatpush1.msra.mxu0 0.0
    %546 = vmatprep.subr.mxu0 0.0
    %547 = vmatpush1.msra.mxu0 0.0
    %548 = vmatprep.subr.mxu0 0.0
    %549 = vmatpush1.msra.mxu0 0.0
    %550 = vmatprep.mubr.f32.mxu0 0.0
    %551 = vmatmul.mubr.f32.gmra.mrb[0].mxu0 %v484
    %v552 = vpop.f32.mrb[0].mxu0
    %v553 = vadd.f32 0.0, %v552
    %v554 = vpop.f32.mrb[0].mxu0
    %555 = vdwg.mxu0
    %v557 = vrot.slane %v553, 2
    %v559 = vadd.f32 %v147, %v557
    %v560 = vxor.u32 %v559, 2147483648
    %v561 = vmul.f32 %v560, 1.442695
    %v562 = vpow.pop %v561
    %v563 = vadd.f32 %v562, 1.0
    %v564 = vrcp.pop %v563
    %v565 = vmul.f32 1.0, %v564
    %v566 = vtanh.pop %v559
    %v568 = vrot.slane %v468, 6
    %v570 = vmul.f32 %v565, %v568
    %572 = vrot.lane.b32.xlu0 %v566, 64
    %v573 = vpop.permute.xlu0 %572
    %v575 = vmul.f32 %v565, %v573
    %577 = vrot.lane.b32.xlu0 %v575, 32
    %v578 = vpop.permute.xlu0 %577
    %v580 = vadd.f32 %v570, %v578
    %v581 = vtanh.pop %v580
    %583 = vrot.lane.b32.xlu0 %v581, 64
    %v584 = vpop.permute.xlu0 %583
    %v586 = vmul.f32 %v565, %v584
    %588 = vrot.lane.b32.xlu0 %v586, 32
    %v589 = vpop.permute.xlu0 %588
    %vm591 = vcmask 261126
    %592 = vst.msk [vmem:[#allocation2] sm:$0xc0] %vm591, %v589
    %v593 = vrot.slane %v586, 6
    %594 = vrot.lane.b32.xlu0 %v593, 32
    %v595 = vpop.permute.xlu0 %594
    %v596 = vsel %vm155, %v595, 0
    %598 = vmatprep.subr.mxu0 0.0
    %599 = vmatpush1.msra.mxu0 %v60
    %600 = vmatprep.subr.mxu0 0.0
    %601 = vmatpush1.msra.mxu0 %v61
    %602 = vmatprep.subr.mxu0 0.0
    %603 = vmatpush1.msra.mxu0 %v62
    %604 = vmatprep.subr.mxu0 0.0
    %605 = vmatpush1.msra.mxu0 %v63
    %606 = vmatprep.subr.mxu0 0.0
    %607 = vmatpush1.msra.mxu0 0.0
    %608 = vmatprep.subr.mxu0 0.0
    %609 = vmatpush1.msra.mxu0 0.0
    %610 = vmatprep.subr.mxu0 0.0
    %611 = vmatpush1.msra.mxu0 0.0
    %612 = vmatprep.subr.mxu0 0.0
    %613 = vmatpush1.msra.mxu0 0.0
    %614 = vmatprep.subr.mxu0 0.0
    %615 = vmatpush1.msra.mxu0 0.0
    %616 = vmatprep.subr.mxu0 0.0
    %617 = vmatpush1.msra.mxu0 0.0
    %618 = vmatprep.subr.mxu0 0.0
    %619 = vmatpush1.msra.mxu0 0.0
    %620 = vmatprep.subr.mxu0 0.0
    %621 = vmatpush1.msra.mxu0 0.0
    %622 = vmatprep.subr.mxu0 0.0
    %623 = vmatpush1.msra.mxu0 0.0
    %624 = vmatprep.subr.mxu0 0.0
    %625 = vmatpush1.msra.mxu0 0.0
    %626 = vmatprep.subr.mxu0 0.0
    %627 = vmatpush1.msra.mxu0 0.0
    %628 = vmatprep.subr.mxu0 0.0
    %629 = vmatpush1.msra.mxu0 0.0
    %630 = vmatprep.subr.mxu0 0.0
    %631 = vmatpush1.msra.mxu0 0.0
    %632 = vmatprep.subr.mxu0 0.0
    %633 = vmatpush1.msra.mxu0 0.0
    %634 = vmatprep.subr.mxu0 0.0
    %635 = vmatpush1.msra.mxu0 0.0
    %636 = vmatprep.subr.mxu0 0.0
    %637 = vmatpush1.msra.mxu0 0.0
    %638 = vmatprep.subr.mxu0 0.0
    %639 = vmatpush1.msra.mxu0 0.0
    %640 = vmatprep.subr.mxu0 0.0
    %641 = vmatpush1.msra.mxu0 0.0
    %642 = vmatprep.subr.mxu0 0.0
    %643 = vmatpush1.msra.mxu0 0.0
    %644 = vmatprep.subr.mxu0 0.0
    %645 = vmatpush1.msra.mxu0 0.0
    %646 = vmatprep.subr.mxu0 0.0
    %647 = vmatpush1.msra.mxu0 0.0
    %648 = vmatprep.subr.mxu0 0.0
    %649 = vmatpush1.msra.mxu0 0.0
    %650 = vmatprep.subr.mxu0 0.0
    %651 = vmatpush1.msra.mxu0 0.0
    %652 = vmatprep.subr.mxu0 0.0
    %653 = vmatpush1.msra.mxu0 0.0
    %654 = vmatprep.subr.mxu0 0.0
    %655 = vmatpush1.msra.mxu0 0.0
    %656 = vmatprep.subr.mxu0 0.0
    %657 = vmatpush1.msra.mxu0 0.0
    %658 = vmatprep.subr.mxu0 0.0
    %659 = vmatpush1.msra.mxu0 0.0
    %660 = vmatprep.subr.mxu0 0.0
    %661 = vmatpush1.msra.mxu0 0.0
    %662 = vmatprep.mubr.f32.mxu0 0.0
    %663 = vmatmul.mubr.f32.gmra.mrb[0].mxu0 %v596
    %v664 = vpop.f32.mrb[0].mxu0
    %v665 = vadd.f32 0.0, %v664
    %v666 = vpop.f32.mrb[0].mxu0
    %667 = vdwg.mxu0
    %v668 = vadd.f32 %v152, %v665
    %v669 = vxor.u32 %v668, 2147483648
    %v670 = vmul.f32 %v669, 1.442695
    %v671 = vpow.pop %v670
    %v672 = vadd.f32 %v671, 1.0
    %v673 = vrcp.pop %v672
    %v674 = vmul.f32 1.0, %v673
    %v675 = vtanh.pop %v668
    %v677 = vrot.slane %v580, 6
    %v679 = vmul.f32 %v674, %v677
    %681 = vrot.lane.b32.xlu0 %v675, 64
    %v682 = vpop.permute.xlu0 %681
    %v684 = vmul.f32 %v674, %v682
    %686 = vrot.lane.b32.xlu0 %v684, 32
    %v687 = vpop.permute.xlu0 %686
    %v689 = vadd.f32 %v679, %v687
    %v690 = vtanh.pop %v689
    %692 = vrot.lane.b32.xlu0 %v690, 64
    %v693 = vpop.permute.xlu0 %692
    %v695 = vmul.f32 %v674, %v693
    %697 = vrot.lane.b32.xlu0 %v695, 32
    %v698 = vpop.permute.xlu0 %697
    %700 = vst.msk [vmem:[#allocation2 + $0x8] sm:$0x3] %vm258, %v698
    %v701 = vsel %vm155, %v698, 0
    %703 = vmatprep.subr.mxu0 0.0
    %704 = vmatpush1.msra.mxu0 %v60
    %705 = vmatprep.subr.mxu0 0.0
    %706 = vmatpush1.msra.mxu0 %v61
    %707 = vmatprep.subr.mxu0 0.0
    %708 = vmatpush1.msra.mxu0 %v62
    %709 = vmatprep.subr.mxu0 0.0
    %710 = vmatpush1.msra.mxu0 %v63
    %711 = vmatprep.subr.mxu0 0.0
    %712 = vmatpush1.msra.mxu0 0.0
    %713 = vmatprep.subr.mxu0 0.0
    %714 = vmatpush1.msra.mxu0 0.0
    %715 = vmatprep.subr.mxu0 0.0
    %716 = vmatpush1.msra.mxu0 0.0
    %717 = vmatprep.subr.mxu0 0.0
    %718 = vmatpush1.msra.mxu0 0.0
    %719 = vmatprep.subr.mxu0 0.0
    %720 = vmatpush1.msra.mxu0 0.0
    %721 = vmatprep.subr.mxu0 0.0
    %722 = vmatpush1.msra.mxu0 0.0
    %723 = vmatprep.subr.mxu0 0.0
    %724 = vmatpush1.msra.mxu0 0.0
    %725 = vmatprep.subr.mxu0 0.0
    %726 = vmatpush1.msra.mxu0 0.0
    %727 = vmatprep.subr.mxu0 0.0
    %728 = vmatpush1.msra.mxu0 0.0
    %729 = vmatprep.subr.mxu0 0.0
    %730 = vmatpush1.msra.mxu0 0.0
    %731 = vmatprep.subr.mxu0 0.0
    %732 = vmatpush1.msra.mxu0 0.0
    %733 = vmatprep.subr.mxu0 0.0
    %734 = vmatpush1.msra.mxu0 0.0
    %735 = vmatprep.subr.mxu0 0.0
    %736 = vmatpush1.msra.mxu0 0.0
    %737 = vmatprep.subr.mxu0 0.0
    %738 = vmatpush1.msra.mxu0 0.0
    %739 = vmatprep.subr.mxu0 0.0
    %740 = vmatpush1.msra.mxu0 0.0
    %741 = vmatprep.subr.mxu0 0.0
    %742 = vmatpush1.msra.mxu0 0.0
    %743 = vmatprep.subr.mxu0 0.0
    %744 = vmatpush1.msra.mxu0 0.0
    %745 = vmatprep.subr.mxu0 0.0
    %746 = vmatpush1.msra.mxu0 0.0
    %747 = vmatprep.subr.mxu0 0.0
    %748 = vmatpush1.msra.mxu0 0.0
    %749 = vmatprep.subr.mxu0 0.0
    %750 = vmatpush1.msra.mxu0 0.0
    %751 = vmatprep.subr.mxu0 0.0
    %752 = vmatpush1.msra.mxu0 0.0
    %753 = vmatprep.subr.mxu0 0.0
    %754 = vmatpush1.msra.mxu0 0.0
    %755 = vmatprep.subr.mxu0 0.0
    %756 = vmatpush1.msra.mxu0 0.0
    %757 = vmatprep.subr.mxu0 0.0
    %758 = vmatpush1.msra.mxu0 0.0
    %759 = vmatprep.subr.mxu0 0.0
    %760 = vmatpush1.msra.mxu0 0.0
    %761 = vmatprep.subr.mxu0 0.0
    %762 = vmatpush1.msra.mxu0 0.0
    %763 = vmatprep.subr.mxu0 0.0
    %764 = vmatpush1.msra.mxu0 0.0
    %765 = vmatprep.subr.mxu0 0.0
    %766 = vmatpush1.msra.mxu0 0.0
    %767 = vmatprep.mubr.f32.mxu0 0.0
    %768 = vmatmul.mubr.f32.gmra.mrb[0].mxu0 %v701
    %v769 = vpop.f32.mrb[0].mxu0
    %v770 = vadd.f32 0.0, %v769
    %v771 = vpop.f32.mrb[0].mxu0
    %772 = vdwg.mxu0
    %v774 = vrot.slane %v770, 6
    %v776 = vadd.f32 %v152, %v774
    %v777 = vxor.u32 %v776, 2147483648
    %v778 = vmul.f32 %v777, 1.442695
    %v779 = vpow.pop %v778
    %v780 = vadd.f32 %v779, 1.0
    %v781 = vrcp.pop %v780
    %v782 = vmul.f32 1.0, %v781
    %v783 = vtanh.pop %v776
    %v785 = vrot.slane %v689, 6
    %v787 = vmul.f32 %v782, %v785
    %789 = vrot.lane.b32.xlu0 %v783, 64
    %v790 = vpop.permute.xlu0 %789
    %v792 = vmul.f32 %v782, %v790
    %794 = vrot.lane.b32.xlu0 %v792, 32
    %v795 = vpop.permute.xlu0 %794
    %v797 = vadd.f32 %v787, %v795
    %v798 = vtanh.pop %v797
    %800 = vrot.lane.b32.xlu0 %v798, 64
    %v801 = vpop.permute.xlu0 %800
    %v803 = vmul.f32 %v782, %v801
    %805 = vrot.lane.b32.xlu0 %v803, 32
    %v806 = vpop.permute.xlu0 %805
    %808 = vst.msk [vmem:[#allocation2 + $0x8] sm:$0xc] %vm367, %v806
    %v809 = vrot.slane %v803, 2
    %810 = vrot.lane.b32.xlu0 %v809, 32
    %v811 = vpop.permute.xlu0 %810
    %v812 = vsel %vm155, %v811, 0
    %814 = vmatprep.subr.mxu0 0.0
    %815 = vmatpush1.msra.mxu0 %v60
    %816 = vmatprep.subr.mxu0 0.0
    %817 = vmatpush1.msra.mxu0 %v61
    %818 = vmatprep.subr.mxu0 0.0
    %819 = vmatpush1.msra.mxu0 %v62
    %820 = vmatprep.subr.mxu0 0.0
    %821 = vmatpush1.msra.mxu0 %v63
    %822 = vmatprep.subr.mxu0 0.0
    %823 = vmatpush1.msra.mxu0 0.0
    %824 = vmatprep.subr.mxu0 0.0
    %825 = vmatpush1.msra.mxu0 0.0
    %826 = vmatprep.subr.mxu0 0.0
    %827 = vmatpush1.msra.mxu0 0.0
    %828 = vmatprep.subr.mxu0 0.0
    %829 = vmatpush1.msra.mxu0 0.0
    %830 = vmatprep.subr.mxu0 0.0
    %831 = vmatpush1.msra.mxu0 0.0
    %832 = vmatprep.subr.mxu0 0.0
    %833 = vmatpush1.msra.mxu0 0.0
    %834 = vmatprep.subr.mxu0 0.0
    %835 = vmatpush1.msra.mxu0 0.0
    %836 = vmatprep.subr.mxu0 0.0
    %837 = vmatpush1.msra.mxu0 0.0
    %838 = vmatprep.subr.mxu0 0.0
    %839 = vmatpush1.msra.mxu0 0.0
    %840 = vmatprep.subr.mxu0 0.0
    %841 = vmatpush1.msra.mxu0 0.0
    %842 = vmatprep.subr.mxu0 0.0
    %843 = vmatpush1.msra.mxu0 0.0
    %844 = vmatprep.subr.mxu0 0.0
    %845 = vmatpush1.msra.mxu0 0.0
    %846 = vmatprep.subr.mxu0 0.0
    %847 = vmatpush1.msra.mxu0 0.0
    %848 = vmatprep.subr.mxu0 0.0
    %849 = vmatpush1.msra.mxu0 0.0
    %850 = vmatprep.subr.mxu0 0.0
    %851 = vmatpush1.msra.mxu0 0.0
    %852 = vmatprep.subr.mxu0 0.0
    %853 = vmatpush1.msra.mxu0 0.0
    %854 = vmatprep.subr.mxu0 0.0
    %855 = vmatpush1.msra.mxu0 0.0
    %856 = vmatprep.subr.mxu0 0.0
    %857 = vmatpush1.msra.mxu0 0.0
    %858 = vmatprep.subr.mxu0 0.0
    %859 = vmatpush1.msra.mxu0 0.0
    %860 = vmatprep.subr.mxu0 0.0
    %861 = vmatpush1.msra.mxu0 0.0
    %862 = vmatprep.subr.mxu0 0.0
    %863 = vmatpush1.msra.mxu0 0.0
    %864 = vmatprep.subr.mxu0 0.0
    %865 = vmatpush1.msra.mxu0 0.0
    %866 = vmatprep.subr.mxu0 0.0
    %867 = vmatpush1.msra.mxu0 0.0
    %868 = vmatprep.subr.mxu0 0.0
    %869 = vmatpush1.msra.mxu0 0.0
    %870 = vmatprep.subr.mxu0 0.0
    %871 = vmatpush1.msra.mxu0 0.0
    %872 = vmatprep.subr.mxu0 0.0
    %873 = vmatpush1.msra.mxu0 0.0
    %874 = vmatprep.subr.mxu0 0.0
    %875 = vmatpush1.msra.mxu0 0.0
    %876 = vmatprep.subr.mxu0 0.0
    %877 = vmatpush1.msra.mxu0 0.0
    %878 = vmatprep.mubr.f32.mxu0 0.0
    %879 = vmatmul.mubr.f32.gmra.mrb[0].mxu0 %v812
    %v880 = vpop.f32.mrb[0].mxu0
    %v881 = vadd.f32 0.0, %v880
    %v882 = vpop.f32.mrb[0].mxu0
    %883 = vdwg.mxu0
    %v885 = vrot.slane %v881, 4
    %v887 = vadd.f32 %v152, %v885
    %v888 = vxor.u32 %v887, 2147483648
    %v889 = vmul.f32 %v888, 1.442695
    %v890 = vpow.pop %v889
    %v891 = vadd.f32 %v890, 1.0
    %v892 = vrcp.pop %v891
    %v893 = vmul.f32 1.0, %v892
    %v894 = vtanh.pop %v887
    %v896 = vrot.slane %v797, 6
    %v898 = vmul.f32 %v893, %v896
    %900 = vrot.lane.b32.xlu0 %v894, 64
    %v901 = vpop.permute.xlu0 %900
    %v903 = vmul.f32 %v893, %v901
    %905 = vrot.lane.b32.xlu0 %v903, 32
    %v906 = vpop.permute.xlu0 %905
    %v908 = vadd.f32 %v898, %v906
    %v909 = vtanh.pop %v908
    %911 = vrot.lane.b32.xlu0 %v909, 64
    %v912 = vpop.permute.xlu0 %911
    %v914 = vmul.f32 %v893, %v912
    %916 = vrot.lane.b32.xlu0 %v914, 32
    %v917 = vpop.permute.xlu0 %916
    %919 = vst.msk [vmem:[#allocation2 + $0x8] sm:$0x30] %vm479, %v917
    %v920 = vrot.slane %v914, 4
    %921 = vrot.lane.b32.xlu0 %v920, 32
    %v922 = vpop.permute.xlu0 %921
    %v923 = vsel %vm155, %v922, 0
    %925 = vmatprep.subr.mxu0 0.0
    %926 = vmatpush1.msra.mxu0 %v60
    %927 = vmatprep.subr.mxu0 0.0
    %928 = vmatpush1.msra.mxu0 %v61
    %929 = vmatprep.subr.mxu0 0.0
    %930 = vmatpush1.msra.mxu0 %v62
    %931 = vmatprep.subr.mxu0 0.0
    %932 = vmatpush1.msra.mxu0 %v63
    %933 = vmatprep.subr.mxu0 0.0
    %934 = vmatpush1.msra.mxu0 0.0
    %935 = vmatprep.subr.mxu0 0.0
    %936 = vmatpush1.msra.mxu0 0.0
    %937 = vmatprep.subr.mxu0 0.0
    %938 = vmatpush1.msra.mxu0 0.0
    %939 = vmatprep.subr.mxu0 0.0
    %940 = vmatpush1.msra.mxu0 0.0
    %941 = vmatprep.subr.mxu0 0.0
    %942 = vmatpush1.msra.mxu0 0.0
    %943 = vmatprep.subr.mxu0 0.0
    %944 = vmatpush1.msra.mxu0 0.0
    %945 = vmatprep.subr.mxu0 0.0
    %946 = vmatpush1.msra.mxu0 0.0
    %947 = vmatprep.subr.mxu0 0.0
    %948 = vmatpush1.msra.mxu0 0.0
    %949 = vmatprep.subr.mxu0 0.0
    %950 = vmatpush1.msra.mxu0 0.0
    %951 = vmatprep.subr.mxu0 0.0
    %952 = vmatpush1.msra.mxu0 0.0
    %953 = vmatprep.subr.mxu0 0.0
    %954 = vmatpush1.msra.mxu0 0.0
    %955 = vmatprep.subr.mxu0 0.0
    %956 = vmatpush1.msra.mxu0 0.0
    %957 = vmatprep.subr.mxu0 0.0
    %958 = vmatpush1.msra.mxu0 0.0
    %959 = vmatprep.subr.mxu0 0.0
    %960 = vmatpush1.msra.mxu0 0.0
    %961 = vmatprep.subr.mxu0 0.0
    %962 = vmatpush1.msra.mxu0 0.0
    %963 = vmatprep.subr.mxu0 0.0
    %964 = vmatpush1.msra.mxu0 0.0
    %965 = vmatprep.subr.mxu0 0.0
    %966 = vmatpush1.msra.mxu0 0.0
    %967 = vmatprep.subr.mxu0 0.0
    %968 = vmatpush1.msra.mxu0 0.0
    %969 = vmatprep.subr.mxu0 0.0
    %970 = vmatpush1.msra.mxu0 0.0
    %971 = vmatprep.subr.mxu0 0.0
    %972 = vmatpush1.msra.mxu0 0.0
    %973 = vmatprep.subr.mxu0 0.0
    %974 = vmatpush1.msra.mxu0 0.0
    %975 = vmatprep.subr.mxu0 0.0
    %976 = vmatpush1.msra.mxu0 0.0
    %977 = vmatprep.subr.mxu0 0.0
    %978 = vmatpush1.msra.mxu0 0.0
    %979 = vmatprep.subr.mxu0 0.0
    %980 = vmatpush1.msra.mxu0 0.0
    %981 = vmatprep.subr.mxu0 0.0
    %982 = vmatpush1.msra.mxu0 0.0
    %983 = vmatprep.subr.mxu0 0.0
    %984 = vmatpush1.msra.mxu0 0.0
    %985 = vmatprep.subr.mxu0 0.0
    %986 = vmatpush1.msra.mxu0 0.0
    %987 = vmatprep.subr.mxu0 0.0
    %988 = vmatpush1.msra.mxu0 0.0
    %989 = vmatprep.mubr.f32.mxu0 0.0
    %990 = vmatmul.mubr.f32.gmra.mrb[0].mxu0 %v923
    %v991 = vpop.f32.mrb[0].mxu0
    %v992 = vadd.f32 0.0, %v991
    %v993 = vpop.f32.mrb[0].mxu0
    %994 = vdwg.mxu0
    %v996 = vrot.slane %v992, 2
    %v998 = vadd.f32 %v152, %v996
    %v999 = vxor.u32 %v998, 2147483648
    %v1000 = vmul.f32 %v999, 1.442695
    %v1001 = vpow.pop %v1000
    %v1002 = vadd.f32 %v1001, 1.0
    %v1003 = vrcp.pop %v1002
    %v1004 = vmul.f32 1.0, %v1003
    %v1005 = vtanh.pop %v998
    %v1007 = vrot.slane %v908, 6
    %v1009 = vmul.f32 %v1004, %v1007
    %1011 = vrot.lane.b32.xlu0 %v1005, 64
    %v1012 = vpop.permute.xlu0 %1011
    %v1014 = vmul.f32 %v1004, %v1012
    %1016 = vrot.lane.b32.xlu0 %v1014, 32
    %v1017 = vpop.permute.xlu0 %1016
    %v1019 = vadd.f32 %v1009, %v1017
    %v1020 = vtanh.pop %v1019
    %1022 = vrot.lane.b32.xlu0 %v1020, 64
    %v1023 = vpop.permute.xlu0 %1022
    %v1025 = vmul.f32 %v1004, %v1023
    %1027 = vrot.lane.b32.xlu0 %v1025, 32
    %v1028 = vpop.permute.xlu0 %1027
    %1030 = vst.msk [vmem:[#allocation2 + $0x8] sm:$0xc0] %vm591, %v1028
    %v1031 = vld [vmem:[%s4] sm:$0xff]
    %v1032 = vld [vmem:[%s4 + $0x8] sm:$0xff]
    %v1033 = vld [vmem:[%s4 + $0x10] sm:$0xff]
    %v1034 = vld [vmem:[%s4 + $0x18] sm:$0xff]
    %v1035 = vld [vmem:[#allocation6] sm:$0xff]
    %v1036 = vld [vmem:[#allocation6 + $0x8] sm:$0xff]
    %v1037 = vld [vmem:[#allocation6 + $0x10] sm:$0xff]
    %v1038 = vld [vmem:[#allocation6 + $0x18] sm:$0xff]
    %v1039 = vld [vmem:[%s6] sm:$0x1]
    %v1040 = vld [vmem:[#allocation2] sm:$0xff]
    %v1041 = vld [vmem:[#allocation2 + $0x8] sm:$0xff]
    %v1043 = vlaneseq
    %v1044 = vshrl.u32 %v1043, 7
    %v1045 = vsub.s32 0, %v1044
    %v1046 = vrot.slane %v1039, %v1045
    %v1049 = vsel %vm155, %v1040, 0
    %v1052 = vsel %vm155, %v1041, 0
    %1054 = vmatprep.subr.mxu0 0.0
    %1055 = vmatpush1.msra.mxu0 %v1031
    %1056 = vmatprep.subr.mxu0 0.0
    %1057 = vmatpush1.msra.mxu0 %v1032
    %1058 = vmatprep.subr.mxu0 0.0
    %1059 = vmatpush1.msra.mxu0 %v1033
    %1060 = vmatprep.subr.mxu0 0.0
    %1061 = vmatpush1.msra.mxu0 %v1034
    %1062 = vmatprep.subr.mxu0 0.0
    %1063 = vmatpush1.msra.mxu0 0.0
    %1064 = vmatprep.subr.mxu0 0.0
    %1065 = vmatpush1.msra.mxu0 0.0
    %1066 = vmatprep.subr.mxu0 0.0
    %1067 = vmatpush1.msra.mxu0 0.0
    %1068 = vmatprep.subr.mxu0 0.0
    %1069 = vmatpush1.msra.mxu0 0.0
    %1070 = vmatprep.subr.mxu0 0.0
    %1071 = vmatpush1.msra.mxu0 0.0
    %1072 = vmatprep.subr.mxu0 0.0
    %1073 = vmatpush1.msra.mxu0 0.0
    %1074 = vmatprep.subr.mxu0 0.0
    %1075 = vmatpush1.msra.mxu0 0.0
    %1076 = vmatprep.subr.mxu0 0.0
    %1077 = vmatpush1.msra.mxu0 0.0
    %1078 = vmatprep.subr.mxu0 0.0
    %1079 = vmatpush1.msra.mxu0 0.0
    %1080 = vmatprep.subr.mxu0 0.0
    %1081 = vmatpush1.msra.mxu0 0.0
    %1082 = vmatprep.subr.mxu0 0.0
    %1083 = vmatpush1.msra.mxu0 0.0
    %1084 = vmatprep.subr.mxu0 0.0
    %1085 = vmatpush1.msra.mxu0 0.0
    %1086 = vmatprep.subr.mxu0 0.0
    %1087 = vmatpush1.msra.mxu0 0.0
    %1088 = vmatprep.subr.mxu0 0.0
    %1089 = vmatpush1.msra.mxu0 0.0
    %1090 = vmatprep.subr.mxu0 0.0
    %1091 = vmatpush1.msra.mxu0 0.0
    %1092 = vmatprep.subr.mxu0 0.0
    %1093 = vmatpush1.msra.mxu0 0.0
    %1094 = vmatprep.subr.mxu0 0.0
    %1095 = vmatpush1.msra.mxu0 0.0
    %1096 = vmatprep.subr.mxu0 0.0
    %1097 = vmatpush1.msra.mxu0 0.0
    %1098 = vmatprep.subr.mxu0 0.0
    %1099 = vmatpush1.msra.mxu0 0.0
    %1100 = vmatprep.subr.mxu0 0.0
    %1101 = vmatpush1.msra.mxu0 0.0
    %1102 = vmatprep.subr.mxu0 0.0
    %1103 = vmatpush1.msra.mxu0 0.0
    %1104 = vmatprep.subr.mxu0 0.0
    %1105 = vmatpush1.msra.mxu0 0.0
    %1106 = vmatprep.subr.mxu0 0.0
    %1107 = vmatpush1.msra.mxu0 0.0
    %1108 = vmatprep.subr.mxu0 0.0
    %1109 = vmatpush1.msra.mxu0 0.0
    %1110 = vmatprep.subr.mxu0 0.0
    %1111 = vmatpush1.msra.mxu0 0.0
    %1112 = vmatprep.subr.mxu0 0.0
    %1113 = vmatpush1.msra.mxu0 0.0
    %1114 = vmatprep.subr.mxu0 0.0
    %1115 = vmatpush1.msra.mxu0 0.0
    %1116 = vmatprep.subr.mxu0 0.0
    %1117 = vmatpush1.msra.mxu0 0.0
    %1118 = vmatprep.mubr.f32.mxu0 0.0
    %1119 = vmatmul.mubr.f32.gmra.mrb[0].mxu0 %v1049
    %v1120 = vpop.f32.mrb[0].mxu0
    %v1121 = vadd.f32 %v1046, %v1120
    %v1122 = vpop.f32.mrb[0].mxu0
    %1123 = vmatprep.mubr.f32.mxu0 0.0
    %1124 = vmatmul.mubr.f32.gmra.mrb[0].mxu0 %v1052
    %v1125 = vpop.f32.mrb[0].mxu0
    %v1126 = vadd.f32 %v1046, %v1125
    %v1127 = vpop.f32.mrb[0].mxu0
    %1128 = vdwg.mxu0
    %1129 = vmatprep.subr.mxu0 0.0
    %1130 = vmatpush1.msra.mxu0 %v1035
    %1131 = vmatprep.subr.mxu0 0.0
    %1132 = vmatpush1.msra.mxu0 %v1036
    %1133 = vmatprep.subr.mxu0 0.0
    %1134 = vmatpush1.msra.mxu0 %v1037
    %1135 = vmatprep.subr.mxu0 0.0
    %1136 = vmatpush1.msra.mxu0 %v1038
    %1137 = vmatprep.subr.mxu0 0.0
    %1138 = vmatpush1.msra.mxu0 0.0
    %1139 = vmatprep.subr.mxu0 0.0
    %1140 = vmatpush1.msra.mxu0 0.0
    %1141 = vmatprep.subr.mxu0 0.0
    %1142 = vmatpush1.msra.mxu0 0.0
    %1143 = vmatprep.subr.mxu0 0.0
    %1144 = vmatpush1.msra.mxu0 0.0
    %1145 = vmatprep.subr.mxu0 0.0
    %1146 = vmatpush1.msra.mxu0 0.0
    %1147 = vmatprep.subr.mxu0 0.0
    %1148 = vmatpush1.msra.mxu0 0.0
    %1149 = vmatprep.subr.mxu0 0.0
    %1150 = vmatpush1.msra.mxu0 0.0
    %1151 = vmatprep.subr.mxu0 0.0
    %1152 = vmatpush1.msra.mxu0 0.0
    %1153 = vmatprep.subr.mxu0 0.0
    %1154 = vmatpush1.msra.mxu0 0.0
    %1155 = vmatprep.subr.mxu0 0.0
    %1156 = vmatpush1.msra.mxu0 0.0
    %1157 = vmatprep.subr.mxu0 0.0
    %1158 = vmatpush1.msra.mxu0 0.0
    %1159 = vmatprep.subr.mxu0 0.0
    %1160 = vmatpush1.msra.mxu0 0.0
    %1161 = vmatprep.subr.mxu0 0.0
    %1162 = vmatpush1.msra.mxu0 0.0
    %1163 = vmatprep.subr.mxu0 0.0
    %1164 = vmatpush1.msra.mxu0 0.0
    %1165 = vmatprep.subr.mxu0 0.0
    %1166 = vmatpush1.msra.mxu0 0.0
    %1167 = vmatprep.subr.mxu0 0.0
    %1168 = vmatpush1.msra.mxu0 0.0
    %1169 = vmatprep.subr.mxu0 0.0
    %1170 = vmatpush1.msra.mxu0 0.0
    %1171 = vmatprep.subr.mxu0 0.0
    %1172 = vmatpush1.msra.mxu0 0.0
    %1173 = vmatprep.subr.mxu0 0.0
    %1174 = vmatpush1.msra.mxu0 0.0
    %1175 = vmatprep.subr.mxu0 0.0
    %1176 = vmatpush1.msra.mxu0 0.0
    %1177 = vmatprep.subr.mxu0 0.0
    %1178 = vmatpush1.msra.mxu0 0.0
    %1179 = vmatprep.subr.mxu0 0.0
    %1180 = vmatpush1.msra.mxu0 0.0
    %1181 = vmatprep.subr.mxu0 0.0
    %1182 = vmatpush1.msra.mxu0 0.0
    %1183 = vmatprep.subr.mxu0 0.0
    %1184 = vmatpush1.msra.mxu0 0.0
    %1185 = vmatprep.subr.mxu0 0.0
    %1186 = vmatpush1.msra.mxu0 0.0
    %1187 = vmatprep.subr.mxu0 0.0
    %1188 = vmatpush1.msra.mxu0 0.0
    %1189 = vmatprep.subr.mxu0 0.0
    %1190 = vmatpush1.msra.mxu0 0.0
    %1191 = vmatprep.subr.mxu0 0.0
    %1192 = vmatpush1.msra.mxu0 0.0
    %1193 = vmatprep.mubr.f32.mxu0 0.0
    %1194 = vmatmul.mubr.f32.gmra.mrb[0].mxu0 %v157
    %v1195 = vpop.f32.mrb[0].mxu0
    %v1196 = vadd.f32 0.0, %v1195
    %v1197 = vpop.f32.mrb[0].mxu0
    %1198 = vdwg.mxu0
    %v1199 = vadd.f32 %v1121, %v1196
    %v1200 = vxor.u32 %v1199, 2147483648
    %v1201 = vmul.f32 %v1200, 1.442695
    %v1202 = vpow.pop %v1201
    %v1203 = vadd.f32 %v1202, 1.0
    %v1204 = vrcp.pop %v1203
    %v1205 = vmul.f32 1.0, %v1204
    %v1206 = vtanh.pop %v1199
    %v1207 = vmul.f32 %v1205, 0.0
    %1209 = vrot.lane.b32.xlu0 %v1206, 64
    %v1210 = vpop.permute.xlu0 %1209
    %v1212 = vmul.f32 %v1205, %v1210
    %1214 = vrot.lane.b32.xlu0 %v1212, 32
    %v1215 = vpop.permute.xlu0 %1214
    %v1217 = vadd.f32 %v1207, %v1215
    %v1218 = vtanh.pop %v1217
    %1220 = vrot.lane.b32.xlu0 %v1218, 64
    %v1221 = vpop.permute.xlu0 %1220
    %v1223 = vmul.f32 %v1205, %v1221
    %1225 = vrot.lane.b32.xlu0 %v1223, 32
    %v1226 = vpop.permute.xlu0 %1225
    %v1227 = vsel %vm155, %v1226, 0
    %1229 = vmatprep.subr.mxu0 0.0
    %1230 = vmatpush1.msra.mxu0 %v1035
    %1231 = vmatprep.subr.mxu0 0.0
    %1232 = vmatpush1.msra.mxu0 %v1036
    %1233 = vmatprep.subr.mxu0 0.0
    %1234 = vmatpush1.msra.mxu0 %v1037
    %1235 = vmatprep.subr.mxu0 0.0
    %1236 = vmatpush1.msra.mxu0 %v1038
    %1237 = vmatprep.subr.mxu0 0.0
    %1238 = vmatpush1.msra.mxu0 0.0
    %1239 = vmatprep.subr.mxu0 0.0
    %1240 = vmatpush1.msra.mxu0 0.0
    %1241 = vmatprep.subr.mxu0 0.0
    %1242 = vmatpush1.msra.mxu0 0.0
    %1243 = vmatprep.subr.mxu0 0.0
    %1244 = vmatpush1.msra.mxu0 0.0
    %1245 = vmatprep.subr.mxu0 0.0
    %1246 = vmatpush1.msra.mxu0 0.0
    %1247 = vmatprep.subr.mxu0 0.0
    %1248 = vmatpush1.msra.mxu0 0.0
    %1249 = vmatprep.subr.mxu0 0.0
    %1250 = vmatpush1.msra.mxu0 0.0
    %1251 = vmatprep.subr.mxu0 0.0
    %1252 = vmatpush1.msra.mxu0 0.0
    %1253 = vmatprep.subr.mxu0 0.0
    %1254 = vmatpush1.msra.mxu0 0.0
    %1255 = vmatprep.subr.mxu0 0.0
    %1256 = vmatpush1.msra.mxu0 0.0
    %1257 = vmatprep.subr.mxu0 0.0
    %1258 = vmatpush1.msra.mxu0 0.0
    %1259 = vmatprep.subr.mxu0 0.0
    %1260 = vmatpush1.msra.mxu0 0.0
    %1261 = vmatprep.subr.mxu0 0.0
    %1262 = vmatpush1.msra.mxu0 0.0
    %1263 = vmatprep.subr.mxu0 0.0
    %1264 = vmatpush1.msra.mxu0 0.0
    %1265 = vmatprep.subr.mxu0 0.0
    %1266 = vmatpush1.msra.mxu0 0.0
    %1267 = vmatprep.subr.mxu0 0.0
    %1268 = vmatpush1.msra.mxu0 0.0
    %1269 = vmatprep.subr.mxu0 0.0
    %1270 = vmatpush1.msra.mxu0 0.0
    %1271 = vmatprep.subr.mxu0 0.0
    %1272 = vmatpush1.msra.mxu0 0.0
    %1273 = vmatprep.subr.mxu0 0.0
    %1274 = vmatpush1.msra.mxu0 0.0
    %1275 = vmatprep.subr.mxu0 0.0
    %1276 = vmatpush1.msra.mxu0 0.0
    %1277 = vmatprep.subr.mxu0 0.0
    %1278 = vmatpush1.msra.mxu0 0.0
    %1279 = vmatprep.subr.mxu0 0.0
    %1280 = vmatpush1.msra.mxu0 0.0
    %1281 = vmatprep.subr.mxu0 0.0
    %1282 = vmatpush1.msra.mxu0 0.0
    %1283 = vmatprep.subr.mxu0 0.0
    %1284 = vmatpush1.msra.mxu0 0.0
    %1285 = vmatprep.subr.mxu0 0.0
    %1286 = vmatpush1.msra.mxu0 0.0
    %1287 = vmatprep.subr.mxu0 0.0
    %1288 = vmatpush1.msra.mxu0 0.0
    %1289 = vmatprep.subr.mxu0 0.0
    %1290 = vmatpush1.msra.mxu0 0.0
    %1291 = vmatprep.subr.mxu0 0.0
    %1292 = vmatpush1.msra.mxu0 0.0
    %1293 = vmatprep.mubr.f32.mxu0 0.0
    %1294 = vmatmul.mubr.f32.gmra.mrb[0].mxu0 %v1227
    %v1295 = vpop.f32.mrb[0].mxu0
    %v1296 = vadd.f32 0.0, %v1295
    %v1297 = vpop.f32.mrb[0].mxu0
    %1298 = vdwg.mxu0
    %v1300 = vrot.slane %v1296, 6
    %v1302 = vadd.f32 %v1121, %v1300
    %v1303 = vxor.u32 %v1302, 2147483648
    %v1304 = vmul.f32 %v1303, 1.442695
    %v1305 = vpow.pop %v1304
    %v1306 = vadd.f32 %v1305, 1.0
    %v1307 = vrcp.pop %v1306
    %v1308 = vmul.f32 1.0, %v1307
    %v1309 = vtanh.pop %v1302
    %v1311 = vrot.slane %v1217, 6
    %v1313 = vmul.f32 %v1308, %v1311
    %1315 = vrot.lane.b32.xlu0 %v1309, 64
    %v1316 = vpop.permute.xlu0 %1315
    %v1318 = vmul.f32 %v1308, %v1316
    %1320 = vrot.lane.b32.xlu0 %v1318, 32
    %v1321 = vpop.permute.xlu0 %1320
    %v1323 = vadd.f32 %v1313, %v1321
    %v1324 = vtanh.pop %v1323
    %1326 = vrot.lane.b32.xlu0 %v1324, 64
    %v1327 = vpop.permute.xlu0 %1326
    %v1329 = vmul.f32 %v1308, %v1327
    %v1331 = vrot.slane %v1329, 2
    %1332 = vrot.lane.b32.xlu0 %v1331, 32
    %v1333 = vpop.permute.xlu0 %1332
    %v1334 = vsel %vm155, %v1333, 0
    %1336 = vmatprep.subr.mxu0 0.0
    %1337 = vmatpush1.msra.mxu0 %v1035
    %1338 = vmatprep.subr.mxu0 0.0
    %1339 = vmatpush1.msra.mxu0 %v1036
    %1340 = vmatprep.subr.mxu0 0.0
    %1341 = vmatpush1.msra.mxu0 %v1037
    %1342 = vmatprep.subr.mxu0 0.0
    %1343 = vmatpush1.msra.mxu0 %v1038
    %1344 = vmatprep.subr.mxu0 0.0
    %1345 = vmatpush1.msra.mxu0 0.0
    %1346 = vmatprep.subr.mxu0 0.0
    %1347 = vmatpush1.msra.mxu0 0.0
    %1348 = vmatprep.subr.mxu0 0.0
    %1349 = vmatpush1.msra.mxu0 0.0
    %1350 = vmatprep.subr.mxu0 0.0
    %1351 = vmatpush1.msra.mxu0 0.0
    %1352 = vmatprep.subr.mxu0 0.0
    %1353 = vmatpush1.msra.mxu0 0.0
    %1354 = vmatprep.subr.mxu0 0.0
    %1355 = vmatpush1.msra.mxu0 0.0
    %1356 = vmatprep.subr.mxu0 0.0
    %1357 = vmatpush1.msra.mxu0 0.0
    %1358 = vmatprep.subr.mxu0 0.0
    %1359 = vmatpush1.msra.mxu0 0.0
    %1360 = vmatprep.subr.mxu0 0.0
    %1361 = vmatpush1.msra.mxu0 0.0
    %1362 = vmatprep.subr.mxu0 0.0
    %1363 = vmatpush1.msra.mxu0 0.0
    %1364 = vmatprep.subr.mxu0 0.0
    %1365 = vmatpush1.msra.mxu0 0.0
    %1366 = vmatprep.subr.mxu0 0.0
    %1367 = vmatpush1.msra.mxu0 0.0
    %1368 = vmatprep.subr.mxu0 0.0
    %1369 = vmatpush1.msra.mxu0 0.0
    %1370 = vmatprep.subr.mxu0 0.0
    %1371 = vmatpush1.msra.mxu0 0.0
    %1372 = vmatprep.subr.mxu0 0.0
    %1373 = vmatpush1.msra.mxu0 0.0
    %1374 = vmatprep.subr.mxu0 0.0
    %1375 = vmatpush1.msra.mxu0 0.0
    %1376 = vmatprep.subr.mxu0 0.0
    %1377 = vmatpush1.msra.mxu0 0.0
    %1378 = vmatprep.subr.mxu0 0.0
    %1379 = vmatpush1.msra.mxu0 0.0
    %1380 = vmatprep.subr.mxu0 0.0
    %1381 = vmatpush1.msra.mxu0 0.0
    %1382 = vmatprep.subr.mxu0 0.0
    %1383 = vmatpush1.msra.mxu0 0.0
    %1384 = vmatprep.subr.mxu0 0.0
    %1385 = vmatpush1.msra.mxu0 0.0
    %1386 = vmatprep.subr.mxu0 0.0
    %1387 = vmatpush1.msra.mxu0 0.0
    %1388 = vmatprep.subr.mxu0 0.0
    %1389 = vmatpush1.msra.mxu0 0.0
    %1390 = vmatprep.subr.mxu0 0.0
    %1391 = vmatpush1.msra.mxu0 0.0
    %1392 = vmatprep.subr.mxu0 0.0
    %1393 = vmatpush1.msra.mxu0 0.0
    %1394 = vmatprep.subr.mxu0 0.0
    %1395 = vmatpush1.msra.mxu0 0.0
    %1396 = vmatprep.subr.mxu0 0.0
    %1397 = vmatpush1.msra.mxu0 0.0
    %1398 = vmatprep.subr.mxu0 0.0
    %1399 = vmatpush1.msra.mxu0 0.0
    %1400 = vmatprep.mubr.f32.mxu0 0.0
    %1401 = vmatmul.mubr.f32.gmra.mrb[0].mxu0 %v1334
    %v1402 = vpop.f32.mrb[0].mxu0
    %v1403 = vadd.f32 0.0, %v1402
    %v1404 = vpop.f32.mrb[0].mxu0
    %1405 = vdwg.mxu0
    %v1407 = vrot.slane %v1403, 4
    %v1409 = vadd.f32 %v1121, %v1407
    %v1410 = vxor.u32 %v1409, 2147483648
    %v1411 = vmul.f32 %v1410, 1.442695
    %v1412 = vpow.pop %v1411
    %v1413 = vadd.f32 %v1412, 1.0
    %v1414 = vrcp.pop %v1413
    %v1415 = vmul.f32 1.0, %v1414
    %v1416 = vtanh.pop %v1409
    %v1418 = vrot.slane %v1323, 6
    %v1420 = vmul.f32 %v1415, %v1418
    %1422 = vrot.lane.b32.xlu0 %v1416, 64
    %v1423 = vpop.permute.xlu0 %1422
    %v1425 = vmul.f32 %v1415, %v1423
    %1427 = vrot.lane.b32.xlu0 %v1425, 32
    %v1428 = vpop.permute.xlu0 %1427
    %v1430 = vadd.f32 %v1420, %v1428
    %v1431 = vtanh.pop %v1430
    %1433 = vrot.lane.b32.xlu0 %v1431, 64
    %v1434 = vpop.permute.xlu0 %1433
    %v1436 = vmul.f32 %v1415, %v1434
    %v1438 = vrot.slane %v1436, 4
    %1439 = vrot.lane.b32.xlu0 %v1438, 32
    %v1440 = vpop.permute.xlu0 %1439
    %v1441 = vsel %vm155, %v1440, 0
    %1443 = vmatprep.subr.mxu0 0.0
    %1444 = vmatpush1.msra.mxu0 %v1035
    %1445 = vmatprep.subr.mxu0 0.0
    %1446 = vmatpush1.msra.mxu0 %v1036
    %1447 = vmatprep.subr.mxu0 0.0
    %1448 = vmatpush1.msra.mxu0 %v1037
    %1449 = vmatprep.subr.mxu0 0.0
    %1450 = vmatpush1.msra.mxu0 %v1038
    %1451 = vmatprep.subr.mxu0 0.0
    %1452 = vmatpush1.msra.mxu0 0.0
    %1453 = vmatprep.subr.mxu0 0.0
    %1454 = vmatpush1.msra.mxu0 0.0
    %1455 = vmatprep.subr.mxu0 0.0
    %1456 = vmatpush1.msra.mxu0 0.0
    %1457 = vmatprep.subr.mxu0 0.0
    %1458 = vmatpush1.msra.mxu0 0.0
    %1459 = vmatprep.subr.mxu0 0.0
    %1460 = vmatpush1.msra.mxu0 0.0
    %1461 = vmatprep.subr.mxu0 0.0
    %1462 = vmatpush1.msra.mxu0 0.0
    %1463 = vmatprep.subr.mxu0 0.0
    %1464 = vmatpush1.msra.mxu0 0.0
    %1465 = vmatprep.subr.mxu0 0.0
    %1466 = vmatpush1.msra.mxu0 0.0
    %1467 = vmatprep.subr.mxu0 0.0
    %1468 = vmatpush1.msra.mxu0 0.0
    %1469 = vmatprep.subr.mxu0 0.0
    %1470 = vmatpush1.msra.mxu0 0.0
    %1471 = vmatprep.subr.mxu0 0.0
    %1472 = vmatpush1.msra.mxu0 0.0
    %1473 = vmatprep.subr.mxu0 0.0
    %1474 = vmatpush1.msra.mxu0 0.0
    %1475 = vmatprep.subr.mxu0 0.0
    %1476 = vmatpush1.msra.mxu0 0.0
    %1477 = vmatprep.subr.mxu0 0.0
    %1478 = vmatpush1.msra.mxu0 0.0
    %1479 = vmatprep.subr.mxu0 0.0
    %1480 = vmatpush1.msra.mxu0 0.0
    %1481 = vmatprep.subr.mxu0 0.0
    %1482 = vmatpush1.msra.mxu0 0.0
    %1483 = vmatprep.subr.mxu0 0.0
    %1484 = vmatpush1.msra.mxu0 0.0
    %1485 = vmatprep.subr.mxu0 0.0
    %1486 = vmatpush1.msra.mxu0 0.0
    %1487 = vmatprep.subr.mxu0 0.0
    %1488 = vmatpush1.msra.mxu0 0.0
    %1489 = vmatprep.subr.mxu0 0.0
    %1490 = vmatpush1.msra.mxu0 0.0
    %1491 = vmatprep.subr.mxu0 0.0
    %1492 = vmatpush1.msra.mxu0 0.0
    %1493 = vmatprep.subr.mxu0 0.0
    %1494 = vmatpush1.msra.mxu0 0.0
    %1495 = vmatprep.subr.mxu0 0.0
    %1496 = vmatpush1.msra.mxu0 0.0
    %1497 = vmatprep.subr.mxu0 0.0
    %1498 = vmatpush1.msra.mxu0 0.0
    %1499 = vmatprep.subr.mxu0 0.0
    %1500 = vmatpush1.msra.mxu0 0.0
    %1501 = vmatprep.subr.mxu0 0.0
    %1502 = vmatpush1.msra.mxu0 0.0
    %1503 = vmatprep.subr.mxu0 0.0
    %1504 = vmatpush1.msra.mxu0 0.0
    %1505 = vmatprep.subr.mxu0 0.0
    %1506 = vmatpush1.msra.mxu0 0.0
    %1507 = vmatprep.mubr.f32.mxu0 0.0
    %1508 = vmatmul.mubr.f32.gmra.mrb[0].mxu0 %v1441
    %v1509 = vpop.f32.mrb[0].mxu0
    %v1510 = vadd.f32 0.0, %v1509
    %v1511 = vpop.f32.mrb[0].mxu0
    %1512 = vdwg.mxu0
    %v1514 = vrot.slane %v1510, 2
    %v1516 = vadd.f32 %v1121, %v1514
    %v1517 = vxor.u32 %v1516, 2147483648
    %v1518 = vmul.f32 %v1517, 1.442695
    %v1519 = vpow.pop %v1518
    %v1520 = vadd.f32 %v1519, 1.0
    %v1521 = vrcp.pop %v1520
    %v1522 = vmul.f32 1.0, %v1521
    %v1523 = vtanh.pop %v1516
    %v1525 = vrot.slane %v1430, 6
    %v1527 = vmul.f32 %v1522, %v1525
    %1529 = vrot.lane.b32.xlu0 %v1523, 64
    %v1530 = vpop.permute.xlu0 %1529
    %v1532 = vmul.f32 %v1522, %v1530
    %1534 = vrot.lane.b32.xlu0 %v1532, 32
    %v1535 = vpop.permute.xlu0 %1534
    %v1537 = vadd.f32 %v1527, %v1535
    %v1538 = vtanh.pop %v1537
    %1540 = vrot.lane.b32.xlu0 %v1538, 64
    %v1541 = vpop.permute.xlu0 %1540
    %v1543 = vmul.f32 %v1522, %v1541
    %v1545 = vrot.slane %v1543, 6
    %1546 = vrot.lane.b32.xlu0 %v1545, 32
    %v1547 = vpop.permute.xlu0 %1546
    %v1548 = vsel %vm155, %v1547, 0
    %1550 = vmatprep.subr.mxu0 0.0
    %1551 = vmatpush1.msra.mxu0 %v1035
    %1552 = vmatprep.subr.mxu0 0.0
    %1553 = vmatpush1.msra.mxu0 %v1036
    %1554 = vmatprep.subr.mxu0 0.0
    %1555 = vmatpush1.msra.mxu0 %v1037
    %1556 = vmatprep.subr.mxu0 0.0
    %1557 = vmatpush1.msra.mxu0 %v1038
    %1558 = vmatprep.subr.mxu0 0.0
    %1559 = vmatpush1.msra.mxu0 0.0
    %1560 = vmatprep.subr.mxu0 0.0
    %1561 = vmatpush1.msra.mxu0 0.0
    %1562 = vmatprep.subr.mxu0 0.0
    %1563 = vmatpush1.msra.mxu0 0.0
    %1564 = vmatprep.subr.mxu0 0.0
    %1565 = vmatpush1.msra.mxu0 0.0
    %1566 = vmatprep.subr.mxu0 0.0
    %1567 = vmatpush1.msra.mxu0 0.0
    %1568 = vmatprep.subr.mxu0 0.0
    %1569 = vmatpush1.msra.mxu0 0.0
    %1570 = vmatprep.subr.mxu0 0.0
    %1571 = vmatpush1.msra.mxu0 0.0
    %1572 = vmatprep.subr.mxu0 0.0
    %1573 = vmatpush1.msra.mxu0 0.0
    %1574 = vmatprep.subr.mxu0 0.0
    %1575 = vmatpush1.msra.mxu0 0.0
    %1576 = vmatprep.subr.mxu0 0.0
    %1577 = vmatpush1.msra.mxu0 0.0
    %1578 = vmatprep.subr.mxu0 0.0
    %1579 = vmatpush1.msra.mxu0 0.0
    %1580 = vmatprep.subr.mxu0 0.0
    %1581 = vmatpush1.msra.mxu0 0.0
    %1582 = vmatprep.subr.mxu0 0.0
    %1583 = vmatpush1.msra.mxu0 0.0
    %1584 = vmatprep.subr.mxu0 0.0
    %1585 = vmatpush1.msra.mxu0 0.0
    %1586 = vmatprep.subr.mxu0 0.0
    %1587 = vmatpush1.msra.mxu0 0.0
    %1588 = vmatprep.subr.mxu0 0.0
    %1589 = vmatpush1.msra.mxu0 0.0
    %1590 = vmatprep.subr.mxu0 0.0
    %1591 = vmatpush1.msra.mxu0 0.0
    %1592 = vmatprep.subr.mxu0 0.0
    %1593 = vmatpush1.msra.mxu0 0.0
    %1594 = vmatprep.subr.mxu0 0.0
    %1595 = vmatpush1.msra.mxu0 0.0
    %1596 = vmatprep.subr.mxu0 0.0
    %1597 = vmatpush1.msra.mxu0 0.0
    %1598 = vmatprep.subr.mxu0 0.0
    %1599 = vmatpush1.msra.mxu0 0.0
    %1600 = vmatprep.subr.mxu0 0.0
    %1601 = vmatpush1.msra.mxu0 0.0
    %1602 = vmatprep.subr.mxu0 0.0
    %1603 = vmatpush1.msra.mxu0 0.0
    %1604 = vmatprep.subr.mxu0 0.0
    %1605 = vmatpush1.msra.mxu0 0.0
    %1606 = vmatprep.subr.mxu0 0.0
    %1607 = vmatpush1.msra.mxu0 0.0
    %1608 = vmatprep.subr.mxu0 0.0
    %1609 = vmatpush1.msra.mxu0 0.0
    %1610 = vmatprep.subr.mxu0 0.0
    %1611 = vmatpush1.msra.mxu0 0.0
    %1612 = vmatprep.subr.mxu0 0.0
    %1613 = vmatpush1.msra.mxu0 0.0
    %1614 = vmatprep.mubr.f32.mxu0 0.0
    %1615 = vmatmul.mubr.f32.gmra.mrb[0].mxu0 %v1548
    %v1616 = vpop.f32.mrb[0].mxu0
    %v1617 = vadd.f32 0.0, %v1616
    %v1618 = vpop.f32.mrb[0].mxu0
    %1619 = vdwg.mxu0
    %v1620 = vadd.f32 %v1126, %v1617
    %v1621 = vxor.u32 %v1620, 2147483648
    %v1622 = vmul.f32 %v1621, 1.442695
    %v1623 = vpow.pop %v1622
    %v1624 = vadd.f32 %v1623, 1.0
    %v1625 = vrcp.pop %v1624
    %v1626 = vmul.f32 1.0, %v1625
    %v1627 = vtanh.pop %v1620
    %v1629 = vrot.slane %v1537, 6
    %v1631 = vmul.f32 %v1626, %v1629
    %1633 = vrot.lane.b32.xlu0 %v1627, 64
    %v1634 = vpop.permute.xlu0 %1633
    %v1636 = vmul.f32 %v1626, %v1634
    %1638 = vrot.lane.b32.xlu0 %v1636, 32
    %v1639 = vpop.permute.xlu0 %1638
    %v1641 = vadd.f32 %v1631, %v1639
    %v1642 = vtanh.pop %v1641
    %1644 = vrot.lane.b32.xlu0 %v1642, 64
    %v1645 = vpop.permute.xlu0 %1644
    %v1647 = vmul.f32 %v1626, %v1645
    %1649 = vrot.lane.b32.xlu0 %v1647, 32
    %v1650 = vpop.permute.xlu0 %1649
    %v1651 = vsel %vm155, %v1650, 0
    %1653 = vmatprep.subr.mxu0 0.0
    %1654 = vmatpush1.msra.mxu0 %v1035
    %1655 = vmatprep.subr.mxu0 0.0
    %1656 = vmatpush1.msra.mxu0 %v1036
    %1657 = vmatprep.subr.mxu0 0.0
    %1658 = vmatpush1.msra.mxu0 %v1037
    %1659 = vmatprep.subr.mxu0 0.0
    %1660 = vmatpush1.msra.mxu0 %v1038
    %1661 = vmatprep.subr.mxu0 0.0
    %1662 = vmatpush1.msra.mxu0 0.0
    %1663 = vmatprep.subr.mxu0 0.0
    %1664 = vmatpush1.msra.mxu0 0.0
    %1665 = vmatprep.subr.mxu0 0.0
    %1666 = vmatpush1.msra.mxu0 0.0
    %1667 = vmatprep.subr.mxu0 0.0
    %1668 = vmatpush1.msra.mxu0 0.0
    %1669 = vmatprep.subr.mxu0 0.0
    %1670 = vmatpush1.msra.mxu0 0.0
    %1671 = vmatprep.subr.mxu0 0.0
    %1672 = vmatpush1.msra.mxu0 0.0
    %1673 = vmatprep.subr.mxu0 0.0
    %1674 = vmatpush1.msra.mxu0 0.0
    %1675 = vmatprep.subr.mxu0 0.0
    %1676 = vmatpush1.msra.mxu0 0.0
    %1677 = vmatprep.subr.mxu0 0.0
    %1678 = vmatpush1.msra.mxu0 0.0
    %1679 = vmatprep.subr.mxu0 0.0
    %1680 = vmatpush1.msra.mxu0 0.0
    %1681 = vmatprep.subr.mxu0 0.0
    %1682 = vmatpush1.msra.mxu0 0.0
    %1683 = vmatprep.subr.mxu0 0.0
    %1684 = vmatpush1.msra.mxu0 0.0
    %1685 = vmatprep.subr.mxu0 0.0
    %1686 = vmatpush1.msra.mxu0 0.0
    %1687 = vmatprep.subr.mxu0 0.0
    %1688 = vmatpush1.msra.mxu0 0.0
    %1689 = vmatprep.subr.mxu0 0.0
    %1690 = vmatpush1.msra.mxu0 0.0
    %1691 = vmatprep.subr.mxu0 0.0
    %1692 = vmatpush1.msra.mxu0 0.0
    %1693 = vmatprep.subr.mxu0 0.0
    %1694 = vmatpush1.msra.mxu0 0.0
    %1695 = vmatprep.subr.mxu0 0.0
    %1696 = vmatpush1.msra.mxu0 0.0
    %1697 = vmatprep.subr.mxu0 0.0
    %1698 = vmatpush1.msra.mxu0 0.0
    %1699 = vmatprep.subr.mxu0 0.0
    %1700 = vmatpush1.msra.mxu0 0.0
    %1701 = vmatprep.subr.mxu0 0.0
    %1702 = vmatpush1.msra.mxu0 0.0
    %1703 = vmatprep.subr.mxu0 0.0
    %1704 = vmatpush1.msra.mxu0 0.0
    %1705 = vmatprep.subr.mxu0 0.0
    %1706 = vmatpush1.msra.mxu0 0.0
    %1707 = vmatprep.subr.mxu0 0.0
    %1708 = vmatpush1.msra.mxu0 0.0
    %1709 = vmatprep.subr.mxu0 0.0
    %1710 = vmatpush1.msra.mxu0 0.0
    %1711 = vmatprep.subr.mxu0 0.0
    %1712 = vmatpush1.msra.mxu0 0.0
    %1713 = vmatprep.subr.mxu0 0.0
    %1714 = vmatpush1.msra.mxu0 0.0
    %1715 = vmatprep.subr.mxu0 0.0
    %1716 = vmatpush1.msra.mxu0 0.0
    %1717 = vmatprep.mubr.f32.mxu0 0.0
    %1718 = vmatmul.mubr.f32.gmra.mrb[0].mxu0 %v1651
    %v1719 = vpop.f32.mrb[0].mxu0
    %v1720 = vadd.f32 0.0, %v1719
    %v1721 = vpop.f32.mrb[0].mxu0
    %1722 = vdwg.mxu0
    %v1724 = vrot.slane %v1720, 6
    %v1726 = vadd.f32 %v1126, %v1724
    %v1727 = vxor.u32 %v1726, 2147483648
    %v1728 = vmul.f32 %v1727, 1.442695
    %v1729 = vpow.pop %v1728
    %v1730 = vadd.f32 %v1729, 1.0
    %v1731 = vrcp.pop %v1730
    %v1732 = vmul.f32 1.0, %v1731
    %v1733 = vtanh.pop %v1726
    %v1735 = vrot.slane %v1641, 6
    %v1737 = vmul.f32 %v1732, %v1735
    %1739 = vrot.lane.b32.xlu0 %v1733, 64
    %v1740 = vpop.permute.xlu0 %1739
    %v1742 = vmul.f32 %v1732, %v1740
    %1744 = vrot.lane.b32.xlu0 %v1742, 32
    %v1745 = vpop.permute.xlu0 %1744
    %v1747 = vadd.f32 %v1737, %v1745
    %v1748 = vtanh.pop %v1747
    %1750 = vrot.lane.b32.xlu0 %v1748, 64
    %v1751 = vpop.permute.xlu0 %1750
    %v1753 = vmul.f32 %v1732, %v1751
    %v1755 = vrot.slane %v1753, 2
    %1756 = vrot.lane.b32.xlu0 %v1755, 32
    %v1757 = vpop.permute.xlu0 %1756
    %v1758 = vsel %vm155, %v1757, 0
    %1760 = vmatprep.subr.mxu0 0.0
    %1761 = vmatpush1.msra.mxu0 %v1035
    %1762 = vmatprep.subr.mxu0 0.0
    %1763 = vmatpush1.msra.mxu0 %v1036
    %1764 = vmatprep.subr.mxu0 0.0
    %1765 = vmatpush1.msra.mxu0 %v1037
    %1766 = vmatprep.subr.mxu0 0.0
    %1767 = vmatpush1.msra.mxu0 %v1038
    %1768 = vmatprep.subr.mxu0 0.0
    %1769 = vmatpush1.msra.mxu0 0.0
    %1770 = vmatprep.subr.mxu0 0.0
    %1771 = vmatpush1.msra.mxu0 0.0
    %1772 = vmatprep.subr.mxu0 0.0
    %1773 = vmatpush1.msra.mxu0 0.0
    %1774 = vmatprep.subr.mxu0 0.0
    %1775 = vmatpush1.msra.mxu0 0.0
    %1776 = vmatprep.subr.mxu0 0.0
    %1777 = vmatpush1.msra.mxu0 0.0
    %1778 = vmatprep.subr.mxu0 0.0
    %1779 = vmatpush1.msra.mxu0 0.0
    %1780 = vmatprep.subr.mxu0 0.0
    %1781 = vmatpush1.msra.mxu0 0.0
    %1782 = vmatprep.subr.mxu0 0.0
    %1783 = vmatpush1.msra.mxu0 0.0
    %1784 = vmatprep.subr.mxu0 0.0
    %1785 = vmatpush1.msra.mxu0 0.0
    %1786 = vmatprep.subr.mxu0 0.0
    %1787 = vmatpush1.msra.mxu0 0.0
    %1788 = vmatprep.subr.mxu0 0.0
    %1789 = vmatpush1.msra.mxu0 0.0
    %1790 = vmatprep.subr.mxu0 0.0
    %1791 = vmatpush1.msra.mxu0 0.0
    %1792 = vmatprep.subr.mxu0 0.0
    %1793 = vmatpush1.msra.mxu0 0.0
    %1794 = vmatprep.subr.mxu0 0.0
    %1795 = vmatpush1.msra.mxu0 0.0
    %1796 = vmatprep.subr.mxu0 0.0
    %1797 = vmatpush1.msra.mxu0 0.0
    %1798 = vmatprep.subr.mxu0 0.0
    %1799 = vmatpush1.msra.mxu0 0.0
    %1800 = vmatprep.subr.mxu0 0.0
    %1801 = vmatpush1.msra.mxu0 0.0
    %1802 = vmatprep.subr.mxu0 0.0
    %1803 = vmatpush1.msra.mxu0 0.0
    %1804 = vmatprep.subr.mxu0 0.0
    %1805 = vmatpush1.msra.mxu0 0.0
    %1806 = vmatprep.subr.mxu0 0.0
    %1807 = vmatpush1.msra.mxu0 0.0
    %1808 = vmatprep.subr.mxu0 0.0
    %1809 = vmatpush1.msra.mxu0 0.0
    %1810 = vmatprep.subr.mxu0 0.0
    %1811 = vmatpush1.msra.mxu0 0.0
    %1812 = vmatprep.subr.mxu0 0.0
    %1813 = vmatpush1.msra.mxu0 0.0
    %1814 = vmatprep.subr.mxu0 0.0
    %1815 = vmatpush1.msra.mxu0 0.0
    %1816 = vmatprep.subr.mxu0 0.0
    %1817 = vmatpush1.msra.mxu0 0.0
    %1818 = vmatprep.subr.mxu0 0.0
    %1819 = vmatpush1.msra.mxu0 0.0
    %1820 = vmatprep.subr.mxu0 0.0
    %1821 = vmatpush1.msra.mxu0 0.0
    %1822 = vmatprep.subr.mxu0 0.0
    %1823 = vmatpush1.msra.mxu0 0.0
    %1824 = vmatprep.mubr.f32.mxu0 0.0
    %1825 = vmatmul.mubr.f32.gmra.mrb[0].mxu0 %v1758
    %v1826 = vpop.f32.mrb[0].mxu0
    %v1827 = vadd.f32 0.0, %v1826
    %v1828 = vpop.f32.mrb[0].mxu0
    %1829 = vdwg.mxu0
    %v1831 = vrot.slane %v1827, 4
    %v1833 = vadd.f32 %v1126, %v1831
    %v1834 = vxor.u32 %v1833, 2147483648
    %v1835 = vmul.f32 %v1834, 1.442695
    %v1836 = vpow.pop %v1835
    %v1837 = vadd.f32 %v1836, 1.0
    %v1838 = vrcp.pop %v1837
    %v1839 = vmul.f32 1.0, %v1838
    %v1840 = vtanh.pop %v1833
    %v1842 = vrot.slane %v1747, 6
    %v1844 = vmul.f32 %v1839, %v1842
    %1846 = vrot.lane.b32.xlu0 %v1840, 64
    %v1847 = vpop.permute.xlu0 %1846
    %v1849 = vmul.f32 %v1839, %v1847
    %1851 = vrot.lane.b32.xlu0 %v1849, 32
    %v1852 = vpop.permute.xlu0 %1851
    %v1854 = vadd.f32 %v1844, %v1852
    %v1855 = vtanh.pop %v1854
    %1857 = vrot.lane.b32.xlu0 %v1855, 64
    %v1858 = vpop.permute.xlu0 %1857
    %v1860 = vmul.f32 %v1839, %v1858
    %v1862 = vrot.slane %v1860, 4
    %1863 = vrot.lane.b32.xlu0 %v1862, 32
    %v1864 = vpop.permute.xlu0 %1863
    %v1865 = vsel %vm155, %v1864, 0
    %1867 = vmatprep.subr.mxu0 0.0
    %1868 = vmatpush1.msra.mxu0 %v1035
    %1869 = vmatprep.subr.mxu0 0.0
    %1870 = vmatpush1.msra.mxu0 %v1036
    %1871 = vmatprep.subr.mxu0 0.0
    %1872 = vmatpush1.msra.mxu0 %v1037
    %1873 = vmatprep.subr.mxu0 0.0
    %1874 = vmatpush1.msra.mxu0 %v1038
    %1875 = vmatprep.subr.mxu0 0.0
    %1876 = vmatpush1.msra.mxu0 0.0
    %1877 = vmatprep.subr.mxu0 0.0
    %1878 = vmatpush1.msra.mxu0 0.0
    %1879 = vmatprep.subr.mxu0 0.0
    %1880 = vmatpush1.msra.mxu0 0.0
    %1881 = vmatprep.subr.mxu0 0.0
    %1882 = vmatpush1.msra.mxu0 0.0
    %1883 = vmatprep.subr.mxu0 0.0
    %1884 = vmatpush1.msra.mxu0 0.0
    %1885 = vmatprep.subr.mxu0 0.0
    %1886 = vmatpush1.msra.mxu0 0.0
    %1887 = vmatprep.subr.mxu0 0.0
    %1888 = vmatpush1.msra.mxu0 0.0
    %1889 = vmatprep.subr.mxu0 0.0
    %1890 = vmatpush1.msra.mxu0 0.0
    %1891 = vmatprep.subr.mxu0 0.0
    %1892 = vmatpush1.msra.mxu0 0.0
    %1893 = vmatprep.subr.mxu0 0.0
    %1894 = vmatpush1.msra.mxu0 0.0
    %1895 = vmatprep.subr.mxu0 0.0
    %1896 = vmatpush1.msra.mxu0 0.0
    %1897 = vmatprep.subr.mxu0 0.0
    %1898 = vmatpush1.msra.mxu0 0.0
    %1899 = vmatprep.subr.mxu0 0.0
    %1900 = vmatpush1.msra.mxu0 0.0
    %1901 = vmatprep.subr.mxu0 0.0
    %1902 = vmatpush1.msra.mxu0 0.0
    %1903 = vmatprep.subr.mxu0 0.0
    %1904 = vmatpush1.msra.mxu0 0.0
    %1905 = vmatprep.subr.mxu0 0.0
    %1906 = vmatpush1.msra.mxu0 0.0
    %1907 = vmatprep.subr.mxu0 0.0
    %1908 = vmatpush1.msra.mxu0 0.0
    %1909 = vmatprep.subr.mxu0 0.0
    %1910 = vmatpush1.msra.mxu0 0.0
    %1911 = vmatprep.subr.mxu0 0.0
    %1912 = vmatpush1.msra.mxu0 0.0
    %1913 = vmatprep.subr.mxu0 0.0
    %1914 = vmatpush1.msra.mxu0 0.0
    %1915 = vmatprep.subr.mxu0 0.0
    %1916 = vmatpush1.msra.mxu0 0.0
    %1917 = vmatprep.subr.mxu0 0.0
    %1918 = vmatpush1.msra.mxu0 0.0
    %1919 = vmatprep.subr.mxu0 0.0
    %1920 = vmatpush1.msra.mxu0 0.0
    %1921 = vmatprep.subr.mxu0 0.0
    %1922 = vmatpush1.msra.mxu0 0.0
    %1923 = vmatprep.subr.mxu0 0.0
    %1924 = vmatpush1.msra.mxu0 0.0
    %1925 = vmatprep.subr.mxu0 0.0
    %1926 = vmatpush1.msra.mxu0 0.0
    %1927 = vmatprep.subr.mxu0 0.0
    %1928 = vmatpush1.msra.mxu0 0.0
    %1929 = vmatprep.subr.mxu0 0.0
    %1930 = vmatpush1.msra.mxu0 0.0
    %1931 = vmatprep.mubr.f32.mxu0 0.0
    %1932 = vmatmul.mubr.f32.gmra.mrb[0].mxu0 %v1865
    %v1933 = vpop.f32.mrb[0].mxu0
    %v1934 = vadd.f32 0.0, %v1933
    %v1935 = vpop.f32.mrb[0].mxu0
    %1936 = vdwg.mxu0
    %v1938 = vrot.slane %v1934, 2
    %v1940 = vadd.f32 %v1126, %v1938
    %v1941 = vxor.u32 %v1940, 2147483648
    %v1942 = vmul.f32 %v1941, 1.442695
    %v1943 = vpow.pop %v1942
    %v1944 = vadd.f32 %v1943, 1.0
    %v1945 = vrcp.pop %v1944
    %v1946 = vmul.f32 1.0, %v1945
    %v1947 = vtanh.pop %v1940
    %v1949 = vrot.slane %v1854, 6
    %v1951 = vmul.f32 %v1946, %v1949
    %1953 = vrot.lane.b32.xlu0 %v1947, 64
    %v1954 = vpop.permute.xlu0 %1953
    %v1956 = vmul.f32 %v1946, %v1954
    %1958 = vrot.lane.b32.xlu0 %v1956, 32
    %v1959 = vpop.permute.xlu0 %1958
    %v1961 = vadd.f32 %v1951, %v1959
    %v1962 = vtanh.pop %v1961
    %1964 = vrot.lane.b32.xlu0 %v1962, 64
    %v1965 = vpop.permute.xlu0 %1964
    %v1967 = vmul.f32 %v1946, %v1965
    %v1968 = vld [vmem:[%s7] sm:$0xff]
    %v1969 = vld [vmem:[%s7 + $0x8] sm:$0xff]
    %v1970 = vld [vmem:[%s7 + $0x10] sm:$0xff]
    %v1971 = vld [vmem:[%s7 + $0x18] sm:$0xff]
    %v1972 = vld [vmem:[%s8] sm:$0x1]
    %v1974 = vlaneseq
    %v1975 = vshrl.u32 %v1974, 7
    %v1976 = vsub.s32 0, %v1975
    %v1977 = vrot.slane %v1972, %v1976
    %v1980 = vrot.slane %v1967, 6
    %1981 = vrot.lane.b32.xlu0 %v1980, 32
    %v1982 = vpop.permute.xlu0 %1981
    %v1983 = vsel %vm155, %v1982, 0
    %1985 = vmatprep.subr.mxu0 0.0
    %1986 = vmatpush1.msra.mxu0 %v1968
    %1987 = vmatprep.subr.mxu0 0.0
    %1988 = vmatpush1.msra.mxu0 %v1969
    %1989 = vmatprep.subr.mxu0 0.0
    %1990 = vmatpush1.msra.mxu0 %v1970
    %1991 = vmatprep.subr.mxu0 0.0
    %1992 = vmatpush1.msra.mxu0 %v1971
    %1993 = vmatprep.subr.mxu0 0.0
    %1994 = vmatpush1.msra.mxu0 0.0
    %1995 = vmatprep.subr.mxu0 0.0
    %1996 = vmatpush1.msra.mxu0 0.0
    %1997 = vmatprep.subr.mxu0 0.0
    %1998 = vmatpush1.msra.mxu0 0.0
    %1999 = vmatprep.subr.mxu0 0.0
    %2000 = vmatpush1.msra.mxu0 0.0
    %2001 = vmatprep.subr.mxu0 0.0
    %2002 = vmatpush1.msra.mxu0 0.0
    %2003 = vmatprep.subr.mxu0 0.0
    %2004 = vmatpush1.msra.mxu0 0.0
    %2005 = vmatprep.subr.mxu0 0.0
    %2006 = vmatpush1.msra.mxu0 0.0
    %2007 = vmatprep.subr.mxu0 0.0
    %2008 = vmatpush1.msra.mxu0 0.0
    %2009 = vmatprep.subr.mxu0 0.0
    %2010 = vmatpush1.msra.mxu0 0.0
    %2011 = vmatprep.subr.mxu0 0.0
    %2012 = vmatpush1.msra.mxu0 0.0
    %2013 = vmatprep.subr.mxu0 0.0
    %2014 = vmatpush1.msra.mxu0 0.0
    %2015 = vmatprep.subr.mxu0 0.0
    %2016 = vmatpush1.msra.mxu0 0.0
    %2017 = vmatprep.subr.mxu0 0.0
    %2018 = vmatpush1.msra.mxu0 0.0
    %2019 = vmatprep.subr.mxu0 0.0
    %2020 = vmatpush1.msra.mxu0 0.0
    %2021 = vmatprep.subr.mxu0 0.0
    %2022 = vmatpush1.msra.mxu0 0.0
    %2023 = vmatprep.subr.mxu0 0.0
    %2024 = vmatpush1.msra.mxu0 0.0
    %2025 = vmatprep.subr.mxu0 0.0
    %2026 = vmatpush1.msra.mxu0 0.0
    %2027 = vmatprep.subr.mxu0 0.0
    %2028 = vmatpush1.msra.mxu0 0.0
    %2029 = vmatprep.subr.mxu0 0.0
    %2030 = vmatpush1.msra.mxu0 0.0
    %2031 = vmatprep.subr.mxu0 0.0
    %2032 = vmatpush1.msra.mxu0 0.0
    %2033 = vmatprep.subr.mxu0 0.0
    %2034 = vmatpush1.msra.mxu0 0.0
    %2035 = vmatprep.subr.mxu0 0.0
    %2036 = vmatpush1.msra.mxu0 0.0
    %2037 = vmatprep.subr.mxu0 0.0
    %2038 = vmatpush1.msra.mxu0 0.0
    %2039 = vmatprep.subr.mxu0 0.0
    %2040 = vmatpush1.msra.mxu0 0.0
    %2041 = vmatprep.subr.mxu0 0.0
    %2042 = vmatpush1.msra.mxu0 0.0
    %2043 = vmatprep.subr.mxu0 0.0
    %2044 = vmatpush1.msra.mxu0 0.0
    %2045 = vmatprep.subr.mxu0 0.0
    %2046 = vmatpush1.msra.mxu0 0.0
    %2047 = vmatprep.subr.mxu0 0.0
    %2048 = vmatpush1.msra.mxu0 0.0
    %2049 = vmatprep.mubr.f32.mxu0 0.0
    %2050 = vmatmul.mubr.f32.gmra.mrb[0].mxu0 %v1983
    %v2051 = vpop.f32.mrb[0].mxu0
    %v2052 = vadd.f32 %v1977, %v2051
    %v2053 = vpop.f32.mrb[0].mxu0
    %2054 = vdwg.mxu0
    %vm2055 = vcmask 25600
    %2056 = vst.msk [vmem:[#allocation8] sm:$0x3] %vm2055, %v2052
    // Predicated region
    $region46: #{tpu_custom_call.1} parent=1 // pred_check
      _
    $region47: #{tpu_custom_call.1} parent=1 // pred_check_branch
      %2058 = sbr.rel (0) target = $region49
    $region48: #{tpu_custom_call.1} parent=1 // pred_region
      %s2060 = ssub.s32 32, 32
      %2061 = vsyncadd [#allocation5], %s2060
      %s2063 = sshll.u32 [#allocation8], 4
      %s2064 = int_to_ptr.vmem [resolvable:$true] %s2063
      %2066 = dma.vmem_to_hbm [thread:$0]  %s2064, 32, %s9, [#allocation5]
    $region49: #{tpu_custom_call.1} parent=1 // pred_fallthru
      _
    // Predicated region
    $region50: #{tpu_custom_call.1} parent=1 // pred_check
      _
    $region51: #{tpu_custom_call.1} parent=1 // pred_check_branch
      %2068 = sbr.rel (0) target = $region53
    $region52: #{tpu_custom_call.1} parent=1 // pred_region
      %2069 = dma.done [#allocation5], 32
    $region53: #{tpu_custom_call.1} parent=1 // pred_fallthru
      _
    %2070 = vsyncpa [#allocation4], 1
    %2071 = vsyncpa [#allocation7], 1
    %2072 = vsyncpa [#allocation5], 1

</llo_original>
